<compile_context>
chip_gen: v6e
topology: v6e:2x2x1
jax: 0.10.0
libtpu: 0.0.40
codegen_flags: <defaults>
</compile_context>

<pallas_src>
import functools

import jax
import jax.numpy as jnp
from jax.experimental import pallas as pl
from jax.experimental.pallas import tpu as pltpu


def _round_up(n, m):
    return ((n + m - 1) // m) * m


def _pad_to(a, shape):
    pads = [(0, s - d) for d, s in zip(a.shape, shape)]
    if all(p == (0, 0) for p in pads):
        return a
    return jnp.pad(a, pads)


def _tm_cap():
    """M-tile cap: 128 on v5-class chips (128x128 MXU), 256 on v6e/v7x."""
    try:
        kind = jax.devices()[0].device_kind.lower()
    except Exception:
        kind = ""
    for old in ("v2", "v3", "v4", "v5"):
        if old in kind:
            return 128
    return 256


# ----------------------------------------------------------------------------
# Kernel 1: fused chain of small layers (weights VMEM-resident).
# Ref order: x, W0, b0, ..., W_{L-1}, b_{L-1}, out.
# ----------------------------------------------------------------------------
def _make_fused_kernel(num_layers, last_activation):
    def kernel(*refs):
        out_ref = refs[-1]
        h = refs[0][...]                                  # bf16 activations
        for i in range(num_layers):
            w = refs[1 + 2 * i][...]                      # bf16 (in_p, out_p)
            b = refs[2 + 2 * i][...]                      # f32  (1, out_p)
            acc = jnp.dot(h, w, preferred_element_type=jnp.float32) + b
            last = i == num_layers - 1
            act = last_activation if last else "relu"
            if act == "relu":
                h = jnp.maximum(acc, 0.0)                 # nn.ReLU(True)
            else:                                         # nn.Sigmoid()
                h = pl.reciprocal(1.0 + jnp.exp(-acc), approx=True)
            if not last:
                h = h.astype(jnp.bfloat16)                # bf16-resident h
        out_ref[...] = h.astype(out_ref.dtype)
    return kernel


def _fused_segment(x, weights_t, biases, last_activation, out_dtype, *, tm_cap):
    num_layers = len(weights_t)
    batch, in_dim = x.shape
    dims = [in_dim] + [w.shape[1] for w in weights_t]
    dims_p = [_round_up(d, 128) for d in dims]            # lane-dense features

    batch_p8 = _round_up(batch, 8)
    tm = min(batch_p8, tm_cap)
    batch_p = _round_up(batch_p8, tm)
    grid = (batch_p // tm,)

    args = [_pad_to(x.astype(jnp.bfloat16), (batch_p, dims_p[0]))]
    in_specs = [pl.BlockSpec((tm, dims_p[0]), lambda i: (i, 0))]
    for li, (w, b) in enumerate(zip(weights_t, biases)):
        ip, op = dims_p[li], dims_p[li + 1]
        args.append(_pad_to(w.astype(jnp.bfloat16), (ip, op)))
        args.append(_pad_to(b.reshape(1, -1).astype(jnp.float32), (1, op)))
        # Constant index_map -> resident across batch tiles, no re-DMA.
        # (On v7x at real sizes these could also use pipeline_mode=pl.Buffered(1)
        #  to drop the default double buffer; budget-capped instead here.)
        in_specs.append(pl.BlockSpec((ip, op), lambda i: (0, 0)))
        in_specs.append(pl.BlockSpec((1, op), lambda i: (0, 0)))

    out_dim_p = dims_p[-1]
    out_specs = pl.BlockSpec((tm, out_dim_p), lambda i: (i, 0))

    flops = 2 * batch_p * sum(dims_p[i] * dims_p[i + 1] for i in range(num_layers))
    bytes_accessed = sum(int(a.size) * a.dtype.itemsize for a in args)
    bytes_accessed += batch_p * out_dim_p * jnp.dtype(out_dtype).itemsize
    trans = batch_p * out_dim_p if last_activation == "sigmoid" else 0
    cost = pl.CostEstimate(flops=int(flops), transcendentals=int(trans),
                           bytes_accessed=int(bytes_accessed))

    out_padded = pl.pallas_call(
        _make_fused_kernel(num_layers, last_activation),
        out_shape=jax.ShapeDtypeStruct((batch_p, out_dim_p), out_dtype),
        grid_spec=pltpu.PrefetchScalarGridSpec(
            num_scalar_prefetch=0,
            grid=grid,
            in_specs=in_specs,
            out_specs=out_specs,
        ),
        compiler_params=pltpu.CompilerParams(
            dimension_semantics=("parallel",),   # batch tiles -> both TCs (v7x)
        ),
        cost_estimate=cost,
    )(*args)
    return out_padded[:batch, :dims[-1]]


# ----------------------------------------------------------------------------
# Kernel 2: K/N-tiled weight-streaming Linear (+ReLU / +Sigmoid).
# grid = (N/tn, M/tm, K/tk); f32 VMEM accumulator; K axis "arbitrary".
# ----------------------------------------------------------------------------
def _make_linear_kernel(activation):
    def kernel(x_ref, w_ref, b_ref, o_ref, acc_ref):
        k = pl.program_id(2)

        @pl.when(k == 0)
        def _():
            acc_ref[...] = jnp.zeros_like(acc_ref)

        acc_ref[...] += jnp.dot(x_ref[...], w_ref[...],
                                preferred_element_type=jnp.float32)

        @pl.when(k == pl.num_programs(2) - 1)
        def _():
            h = acc_ref[...] + b_ref[...]
            if activation == "relu":
                h = jnp.maximum(h, 0.0)
            else:
                h = pl.reciprocal(1.0 + jnp.exp(-h), approx=True)
            o_ref[...] = h.astype(o_ref.dtype)
    return kernel


def _tiled_linear(x, w_t, b, activation, out_dtype, *, tm_cap,
                  tn_max=512, tk_max=512):
    batch, k_dim = x.shape
    _, n_dim = w_t.shape

    batch_p8 = _round_up(batch, 8)
    tm = min(batch_p8, tm_cap)
    batch_p = _round_up(batch_p8, tm)

    k_p = _round_up(k_dim, 128)
    tk = min(k_p, tk_max)
    k_p = _round_up(k_p, tk)

    n_p = _round_up(n_dim, 128)
    tn = min(n_p, tn_max)
    n_p = _round_up(n_p, tn)

    x_p = _pad_to(x.astype(jnp.bfloat16), (batch_p, k_p))
    w_p = _pad_to(w_t.astype(jnp.bfloat16), (k_p, n_p))
    b_p = _pad_to(b.reshape(1, -1).astype(jnp.float32), (1, n_p))

    # N leads the grid and is "parallel": on v7x each TensorCore streams a
    # disjoint half of the weight matrix (weight bytes read once).
    grid = (n_p // tn, batch_p // tm, k_p // tk)

    flops = 2 * batch_p * k_p * n_p
    bytes_accessed = (int(x_p.size) * 2 * (n_p // tn)
                      + int(w_p.size) * 2 * (batch_p // tm)
                      + int(b_p.size) * 4
                      + batch_p * n_p * jnp.dtype(out_dtype).itemsize)
    trans = batch_p * n_p if activation == "sigmoid" else 0
    cost = pl.CostEstimate(flops=int(flops), transcendentals=int(trans),
                           bytes_accessed=int(bytes_accessed))

    out_p = pl.pallas_call(
        _make_linear_kernel(activation),
        out_shape=jax.ShapeDtypeStruct((batch_p, n_p), out_dtype),
        grid_spec=pltpu.PrefetchScalarGridSpec(
            num_scalar_prefetch=0,
            grid=grid,
            in_specs=[
                pl.BlockSpec((tm, tk), lambda j, i, k: (i, k)),
                pl.BlockSpec((tk, tn), lambda j, i, k: (k, j)),
                pl.BlockSpec((1, tn), lambda j, i, k: (0, j)),
            ],
            out_specs=pl.BlockSpec((tm, tn), lambda j, i, k: (i, j)),
            scratch_shapes=[pltpu.VMEM((tm, tn), jnp.float32)],
        ),
        compiler_params=pltpu.CompilerParams(
            dimension_semantics=("parallel", "parallel", "arbitrary")),
        cost_estimate=cost,
    )(x_p, w_p, b_p)
    return out_p[:batch, :n_dim]


# ----------------------------------------------------------------------------
# Full forward pass: route layers to fused / tiled kernels by weight size.
# ----------------------------------------------------------------------------
@functools.partial(jax.jit,
                   static_argnames=("max_fused_weight_bytes", "tn_max", "tk_max"))
def network_forward(x, weights_t, biases, *,
                    max_fused_weight_bytes=4 * 1024 * 1024,
                    tn_max=512, tk_max=512):
    """Forward pass of the autoencoder.

    Args:
      x:         (batch, input_size) f32
      weights_t: list of (in_features, out_features) f32  (already W.T)
      biases:    list of (out_features,) f32
    Returns:
      (batch, output_size) f32 in [0, 1] (sigmoid output).
    """
    num_layers = len(weights_t)
    tm_cap = _tm_cap()

    def w_bytes(w):
        return _round_up(w.shape[0], 128) * _round_up(w.shape[1], 128) * 2  # bf16

    # Greedy grouping: consecutive layers whose padded bf16 weights stay under
    # the resident budget are fused into one kernel; bigger layers are streamed
    # through the K/N-tiled matmul kernel (the real 1.2Mx10K / 10Kx1.2M path).
    groups, cur, cur_bytes = [], [], 0
    for li, w in enumerate(weights_t):
        wb = w_bytes(w)
        if wb > max_fused_weight_bytes:
            if cur:
                groups.append(("fused", cur))
                cur, cur_bytes = [], 0
            groups.append(("tiled", li))
        elif cur_bytes + wb > max_fused_weight_bytes:
            groups.append(("fused", cur))
            cur, cur_bytes = [li], wb
        else:
            cur.append(li)
            cur_bytes += wb
    if cur:
        groups.append(("fused", cur))

    h = x
    for kind, item in groups:
        if kind == "tiled":
            li = item
            is_last = li == num_layers - 1
            act = "sigmoid" if is_last else "relu"
            out_dtype = jnp.float32 if is_last else jnp.bfloat16
            h = _tiled_linear(h, weights_t[li], biases[li], act, out_dtype,
                              tm_cap=tm_cap, tn_max=tn_max, tk_max=tk_max)
        else:
            idxs = item
            is_last = idxs[-1] == num_layers - 1
            act = "sigmoid" if is_last else "relu"
            out_dtype = jnp.float32 if is_last else jnp.bfloat16
            h = _fused_segment(h, [weights_t[i] for i in idxs],
                               [biases[i] for i in idxs],
                               act, out_dtype, tm_cap=tm_cap)
    return h


# ----------------------------------------------------------------------------
# Params + pure-JAX reference.
# ----------------------------------------------------------------------------
def init_params(key, sizes):
    """PyTorch-style (Kaiming-uniform-ish) Linear init; weights stored as W.T."""
    weights_t, biases = [], []
    for i in range(len(sizes) - 1):
        fan_in, fan_out = sizes[i], sizes[i + 1]
        key, wk, bk = jax.random.split(key, 3)
        bound = 1.0 / (fan_in ** 0.5)
        weights_t.append(jax.random.uniform(
            wk, (fan_in, fan_out), jnp.float32, minval=-bound, maxval=bound))
        biases.append(jax.random.uniform(
            bk, (fan_out,), jnp.float32, minval=-bound, maxval=bound))
    return weights_t, biases


def reference_forward(x, weights_t, biases):
    """Pure-JAX reference with the same bf16-operand / f32-accum matmuls."""
    h = x
    n = len(weights_t)
    for i in range(n):
        h = jnp.dot(h.astype(jnp.bfloat16),
                    weights_t[i].astype(jnp.bfloat16),
                    preferred_element_type=jnp.float32) + biases[i]
        if i < n - 1:
            h = jnp.maximum(h, 0.0)
        else:
            h = jax.nn.sigmoid(h)
    return h


if __name__ == "__main__":
    # Scaled-down, structurally identical denoising_model:
    #   encoder: 300 -> 160 -> 96 -> 64 -> 48 -> 32   (Linear+ReLU each)
    #   decoder: 32 -> 48 -> 64 -> 96 -> 160 -> 300   (Linear+ReLU, last Sigmoid)
    # (original: 1199882 -> 10000 -> 1000 -> 256 -> 128 -> 64 -> mirror)
    sizes = [300, 160, 96, 64, 48, 32, 48, 64, 96, 160, 300]
    batch = 8   # test-size batch; realistic batch exercises the tiling/pipeline

    key = jax.random.PRNGKey(0)
    key, xk = jax.random.split(key)
    x = jax.random.uniform(xk, (batch, sizes[0]), jnp.float32)
    weights_t, biases = init_params(key, sizes)

    ref = reference_forward(x, weights_t, biases)

    # Path A: every layer fits the resident budget -> one fused kernel.
    out_a = jax.block_until_ready(network_forward(x, weights_t, biases))
    assert out_a.shape == (batch, sizes[-1]), out_a.shape
    assert jnp.allclose(out_a, ref, atol=3e-3, rtol=1e-2), "fused path mismatch"

    # Path B: force the widest layers through the K/N-tiled streaming-matmul
    # kernel (the code path the real 1.2M/10K-wide layers take).
    out_b = jax.block_until_ready(network_forward(
        x, weights_t, biases,
        max_fused_weight_bytes=96 * 1024, tn_max=128, tk_max=128))
    assert out_b.shape == (batch, sizes[-1]), out_b.shape
    assert jnp.allclose(out_b, ref, atol=3e-3, rtol=1e-2), "tiled path mismatch"

    print("KERNEL_OK")
</pallas_src>

<mosaic_0001>
module attributes {stable_mosaic.version = 11 : i64} {
  func.func @kernel(%arg0: i32, %arg1: memref<8x384xbf16, #tpu.memory_space<vmem>>, %arg2: memref<384x256xbf16, #tpu.memory_space<vmem>>, %arg3: memref<1x256xf32, #tpu.memory_space<vmem>>, %arg4: memref<256x128xbf16, #tpu.memory_space<vmem>>, %arg5: memref<1x128xf32, #tpu.memory_space<vmem>>, %arg6: memref<128x128xbf16, #tpu.memory_space<vmem>>, %arg7: memref<1x128xf32, #tpu.memory_space<vmem>>, %arg8: memref<128x128xbf16, #tpu.memory_space<vmem>>, %arg9: memref<1x128xf32, #tpu.memory_space<vmem>>, %arg10: memref<128x128xbf16, #tpu.memory_space<vmem>>, %arg11: memref<1x128xf32, #tpu.memory_space<vmem>>, %arg12: memref<128x128xbf16, #tpu.memory_space<vmem>>, %arg13: memref<1x128xf32, #tpu.memory_space<vmem>>, %arg14: memref<128x128xbf16, #tpu.memory_space<vmem>>, %arg15: memref<1x128xf32, #tpu.memory_space<vmem>>, %arg16: memref<128x128xbf16, #tpu.memory_space<vmem>>, %arg17: memref<1x128xf32, #tpu.memory_space<vmem>>, %arg18: memref<128x256xbf16, #tpu.memory_space<vmem>>, %arg19: memref<1x256xf32, #tpu.memory_space<vmem>>, %arg20: memref<256x384xbf16, #tpu.memory_space<vmem>>, %arg21: memref<1x384xf32, #tpu.memory_space<vmem>>, %arg22: memref<8x384xf32, #tpu.memory_space<vmem>>) attributes {dimension_semantics = [#tpu.dimension_semantics<parallel>], iteration_bounds = array<i64: 1>, scalar_prefetch = 0 : i64, scratch_operands = 0 : i64, tpu.core_type = #tpu.core_type<tc>, window_params = [{transform_indices = @transform_0, window_bounds = array<i64: 8, 384>}, {pipeline_mode = #tpu.pipeline_mode<synchronous>, transform_indices = @transform_1, window_bounds = array<i64: 384, 256>}, {pipeline_mode = #tpu.pipeline_mode<synchronous>, transform_indices = @transform_2, window_bounds = array<i64: 1, 256>}, {pipeline_mode = #tpu.pipeline_mode<synchronous>, transform_indices = @transform_3, window_bounds = array<i64: 256, 128>}, {pipeline_mode = #tpu.pipeline_mode<synchronous>, transform_indices = @transform_4, window_bounds = array<i64: 1, 128>}, {pipeline_mode = #tpu.pipeline_mode<synchronous>, transform_indices = @transform_5, window_bounds = array<i64: 128, 128>}, {pipeline_mode = #tpu.pipeline_mode<synchronous>, transform_indices = @transform_6, window_bounds = array<i64: 1, 128>}, {pipeline_mode = #tpu.pipeline_mode<synchronous>, transform_indices = @transform_7, window_bounds = array<i64: 128, 128>}, {pipeline_mode = #tpu.pipeline_mode<synchronous>, transform_indices = @transform_8, window_bounds = array<i64: 1, 128>}, {pipeline_mode = #tpu.pipeline_mode<synchronous>, transform_indices = @transform_9, window_bounds = array<i64: 128, 128>}, {pipeline_mode = #tpu.pipeline_mode<synchronous>, transform_indices = @transform_10, window_bounds = array<i64: 1, 128>}, {pipeline_mode = #tpu.pipeline_mode<synchronous>, transform_indices = @transform_11, window_bounds = array<i64: 128, 128>}, {pipeline_mode = #tpu.pipeline_mode<synchronous>, transform_indices = @transform_12, window_bounds = array<i64: 1, 128>}, {pipeline_mode = #tpu.pipeline_mode<synchronous>, transform_indices = @transform_13, window_bounds = array<i64: 128, 128>}, {pipeline_mode = #tpu.pipeline_mode<synchronous>, transform_indices = @transform_14, window_bounds = array<i64: 1, 128>}, {pipeline_mode = #tpu.pipeline_mode<synchronous>, transform_indices = @transform_15, window_bounds = array<i64: 128, 128>}, {pipeline_mode = #tpu.pipeline_mode<synchronous>, transform_indices = @transform_16, window_bounds = array<i64: 1, 128>}, {pipeline_mode = #tpu.pipeline_mode<synchronous>, transform_indices = @transform_17, window_bounds = array<i64: 128, 256>}, {pipeline_mode = #tpu.pipeline_mode<synchronous>, transform_indices = @transform_18, window_bounds = array<i64: 1, 256>}, {pipeline_mode = #tpu.pipeline_mode<synchronous>, transform_indices = @transform_19, window_bounds = array<i64: 256, 384>}, {pipeline_mode = #tpu.pipeline_mode<synchronous>, transform_indices = @transform_20, window_bounds = array<i64: 1, 384>}, {transform_indices = @transform_21, window_bounds = array<i64: 8, 384>}]} {
    %c0 = arith.constant 0 : index
    %c0_0 = arith.constant 0 : index
    %0 = vector.load %arg1[%c0, %c0_0] : memref<8x384xbf16, #tpu.memory_space<vmem>>, vector<8x384xbf16>
    %c0_1 = arith.constant 0 : index
    %c0_2 = arith.constant 0 : index
    %1 = vector.load %arg2[%c0_1, %c0_2] : memref<384x256xbf16, #tpu.memory_space<vmem>>, vector<384x256xbf16>
    %c0_3 = arith.constant 0 : index
    %c0_4 = arith.constant 0 : index
    %2 = vector.load %arg3[%c0_3, %c0_4] : memref<1x256xf32, #tpu.memory_space<vmem>>, vector<1x256xf32>
    %cst = arith.constant dense<0.000000e+00> : vector<8x256xf32>
    %3 = tpu.matmul %0, %1, %cst {dimension_numbers = #tpu.dot_dimension_numbers<[1], [0], [0], [1], [0, 0, 1, 1], [], []>} : vector<8x384xbf16>, vector<384x256xbf16>, vector<8x256xf32> -> vector<8x256xf32>
    %4 = vector.broadcast %2 : vector<1x256xf32> to vector<8x256xf32>
    %5 = arith.addf %3, %4 : vector<8x256xf32>
    %cst_5 = arith.constant 0.000000e+00 : f32
    %6 = vector.broadcast %cst_5 : f32 to vector<8x256xf32>
    %7 = arith.maximumf %5, %6 : vector<8x256xf32>
    %8 = arith.truncf %7 : vector<8x256xf32> to vector<8x256xbf16>
    %c0_6 = arith.constant 0 : index
    %c0_7 = arith.constant 0 : index
    %9 = vector.load %arg4[%c0_6, %c0_7] : memref<256x128xbf16, #tpu.memory_space<vmem>>, vector<256x128xbf16>
    %c0_8 = arith.constant 0 : index
    %c0_9 = arith.constant 0 : index
    %10 = vector.load %arg5[%c0_8, %c0_9] : memref<1x128xf32, #tpu.memory_space<vmem>>, vector<1x128xf32>
    %cst_10 = arith.constant dense<0.000000e+00> : vector<8x128xf32>
    %11 = tpu.matmul %8, %9, %cst_10 {dimension_numbers = #tpu.dot_dimension_numbers<[1], [0], [0], [1], [0, 0, 1, 1], [], []>} : vector<8x256xbf16>, vector<256x128xbf16>, vector<8x128xf32> -> vector<8x128xf32>
    %12 = vector.broadcast %10 : vector<1x128xf32> to vector<8x128xf32>
    %13 = arith.addf %11, %12 : vector<8x128xf32>
    %cst_11 = arith.constant 0.000000e+00 : f32
    %14 = vector.broadcast %cst_11 : f32 to vector<8x128xf32>
    %15 = arith.maximumf %13, %14 : vector<8x128xf32>
    %16 = arith.truncf %15 : vector<8x128xf32> to vector<8x128xbf16>
    %c0_12 = arith.constant 0 : index
    %c0_13 = arith.constant 0 : index
    %17 = vector.load %arg6[%c0_12, %c0_13] : memref<128x128xbf16, #tpu.memory_space<vmem>>, vector<128x128xbf16>
    %c0_14 = arith.constant 0 : index
    %c0_15 = arith.constant 0 : index
    %18 = vector.load %arg7[%c0_14, %c0_15] : memref<1x128xf32, #tpu.memory_space<vmem>>, vector<1x128xf32>
    %cst_16 = arith.constant dense<0.000000e+00> : vector<8x128xf32>
    %19 = tpu.matmul %16, %17, %cst_16 {dimension_numbers = #tpu.dot_dimension_numbers<[1], [0], [0], [1], [0, 0, 1, 1], [], []>} : vector<8x128xbf16>, vector<128x128xbf16>, vector<8x128xf32> -> vector<8x128xf32>
    %20 = vector.broadcast %18 : vector<1x128xf32> to vector<8x128xf32>
    %21 = arith.addf %19, %20 : vector<8x128xf32>
    %cst_17 = arith.constant 0.000000e+00 : f32
    %22 = vector.broadcast %cst_17 : f32 to vector<8x128xf32>
    %23 = arith.maximumf %21, %22 : vector<8x128xf32>
    %24 = arith.truncf %23 : vector<8x128xf32> to vector<8x128xbf16>
    %c0_18 = arith.constant 0 : index
    %c0_19 = arith.constant 0 : index
    %25 = vector.load %arg8[%c0_18, %c0_19] : memref<128x128xbf16, #tpu.memory_space<vmem>>, vector<128x128xbf16>
    %c0_20 = arith.constant 0 : index
    %c0_21 = arith.constant 0 : index
    %26 = vector.load %arg9[%c0_20, %c0_21] : memref<1x128xf32, #tpu.memory_space<vmem>>, vector<1x128xf32>
    %cst_22 = arith.constant dense<0.000000e+00> : vector<8x128xf32>
    %27 = tpu.matmul %24, %25, %cst_22 {dimension_numbers = #tpu.dot_dimension_numbers<[1], [0], [0], [1], [0, 0, 1, 1], [], []>} : vector<8x128xbf16>, vector<128x128xbf16>, vector<8x128xf32> -> vector<8x128xf32>
    %28 = vector.broadcast %26 : vector<1x128xf32> to vector<8x128xf32>
    %29 = arith.addf %27, %28 : vector<8x128xf32>
    %cst_23 = arith.constant 0.000000e+00 : f32
    %30 = vector.broadcast %cst_23 : f32 to vector<8x128xf32>
    %31 = arith.maximumf %29, %30 : vector<8x128xf32>
    %32 = arith.truncf %31 : vector<8x128xf32> to vector<8x128xbf16>
    %c0_24 = arith.constant 0 : index
    %c0_25 = arith.constant 0 : index
    %33 = vector.load %arg10[%c0_24, %c0_25] : memref<128x128xbf16, #tpu.memory_space<vmem>>, vector<128x128xbf16>
    %c0_26 = arith.constant 0 : index
    %c0_27 = arith.constant 0 : index
    %34 = vector.load %arg11[%c0_26, %c0_27] : memref<1x128xf32, #tpu.memory_space<vmem>>, vector<1x128xf32>
    %cst_28 = arith.constant dense<0.000000e+00> : vector<8x128xf32>
    %35 = tpu.matmul %32, %33, %cst_28 {dimension_numbers = #tpu.dot_dimension_numbers<[1], [0], [0], [1], [0, 0, 1, 1], [], []>} : vector<8x128xbf16>, vector<128x128xbf16>, vector<8x128xf32> -> vector<8x128xf32>
    %36 = vector.broadcast %34 : vector<1x128xf32> to vector<8x128xf32>
    %37 = arith.addf %35, %36 : vector<8x128xf32>
    %cst_29 = arith.constant 0.000000e+00 : f32
    %38 = vector.broadcast %cst_29 : f32 to vector<8x128xf32>
    %39 = arith.maximumf %37, %38 : vector<8x128xf32>
    %40 = arith.truncf %39 : vector<8x128xf32> to vector<8x128xbf16>
    %c0_30 = arith.constant 0 : index
    %c0_31 = arith.constant 0 : index
    %41 = vector.load %arg12[%c0_30, %c0_31] : memref<128x128xbf16, #tpu.memory_space<vmem>>, vector<128x128xbf16>
    %c0_32 = arith.constant 0 : index
    %c0_33 = arith.constant 0 : index
    %42 = vector.load %arg13[%c0_32, %c0_33] : memref<1x128xf32, #tpu.memory_space<vmem>>, vector<1x128xf32>
    %cst_34 = arith.constant dense<0.000000e+00> : vector<8x128xf32>
    %43 = tpu.matmul %40, %41, %cst_34 {dimension_numbers = #tpu.dot_dimension_numbers<[1], [0], [0], [1], [0, 0, 1, 1], [], []>} : vector<8x128xbf16>, vector<128x128xbf16>, vector<8x128xf32> -> vector<8x128xf32>
    %44 = vector.broadcast %42 : vector<1x128xf32> to vector<8x128xf32>
    %45 = arith.addf %43, %44 : vector<8x128xf32>
    %cst_35 = arith.constant 0.000000e+00 : f32
    %46 = vector.broadcast %cst_35 : f32 to vector<8x128xf32>
    %47 = arith.maximumf %45, %46 : vector<8x128xf32>
    %48 = arith.truncf %47 : vector<8x128xf32> to vector<8x128xbf16>
    %c0_36 = arith.constant 0 : index
    %c0_37 = arith.constant 0 : index
    %49 = vector.load %arg14[%c0_36, %c0_37] : memref<128x128xbf16, #tpu.memory_space<vmem>>, vector<128x128xbf16>
    %c0_38 = arith.constant 0 : index
    %c0_39 = arith.constant 0 : index
    %50 = vector.load %arg15[%c0_38, %c0_39] : memref<1x128xf32, #tpu.memory_space<vmem>>, vector<1x128xf32>
    %cst_40 = arith.constant dense<0.000000e+00> : vector<8x128xf32>
    %51 = tpu.matmul %48, %49, %cst_40 {dimension_numbers = #tpu.dot_dimension_numbers<[1], [0], [0], [1], [0, 0, 1, 1], [], []>} : vector<8x128xbf16>, vector<128x128xbf16>, vector<8x128xf32> -> vector<8x128xf32>
    %52 = vector.broadcast %50 : vector<1x128xf32> to vector<8x128xf32>
    %53 = arith.addf %51, %52 : vector<8x128xf32>
    %cst_41 = arith.constant 0.000000e+00 : f32
    %54 = vector.broadcast %cst_41 : f32 to vector<8x128xf32>
    %55 = arith.maximumf %53, %54 : vector<8x128xf32>
    %56 = arith.truncf %55 : vector<8x128xf32> to vector<8x128xbf16>
    %c0_42 = arith.constant 0 : index
    %c0_43 = arith.constant 0 : index
    %57 = vector.load %arg16[%c0_42, %c0_43] : memref<128x128xbf16, #tpu.memory_space<vmem>>, vector<128x128xbf16>
    %c0_44 = arith.constant 0 : index
    %c0_45 = arith.constant 0 : index
    %58 = vector.load %arg17[%c0_44, %c0_45] : memref<1x128xf32, #tpu.memory_space<vmem>>, vector<1x128xf32>
    %cst_46 = arith.constant dense<0.000000e+00> : vector<8x128xf32>
    %59 = tpu.matmul %56, %57, %cst_46 {dimension_numbers = #tpu.dot_dimension_numbers<[1], [0], [0], [1], [0, 0, 1, 1], [], []>} : vector<8x128xbf16>, vector<128x128xbf16>, vector<8x128xf32> -> vector<8x128xf32>
    %60 = vector.broadcast %58 : vector<1x128xf32> to vector<8x128xf32>
    %61 = arith.addf %59, %60 : vector<8x128xf32>
    %cst_47 = arith.constant 0.000000e+00 : f32
    %62 = vector.broadcast %cst_47 : f32 to vector<8x128xf32>
    %63 = arith.maximumf %61, %62 : vector<8x128xf32>
    %64 = arith.truncf %63 : vector<8x128xf32> to vector<8x128xbf16>
    %c0_48 = arith.constant 0 : index
    %c0_49 = arith.constant 0 : index
    %65 = vector.load %arg18[%c0_48, %c0_49] : memref<128x256xbf16, #tpu.memory_space<vmem>>, vector<128x256xbf16>
    %c0_50 = arith.constant 0 : index
    %c0_51 = arith.constant 0 : index
    %66 = vector.load %arg19[%c0_50, %c0_51] : memref<1x256xf32, #tpu.memory_space<vmem>>, vector<1x256xf32>
    %cst_52 = arith.constant dense<0.000000e+00> : vector<8x256xf32>
    %67 = tpu.matmul %64, %65, %cst_52 {dimension_numbers = #tpu.dot_dimension_numbers<[1], [0], [0], [1], [0, 0, 1, 1], [], []>} : vector<8x128xbf16>, vector<128x256xbf16>, vector<8x256xf32> -> vector<8x256xf32>
    %68 = vector.broadcast %66 : vector<1x256xf32> to vector<8x256xf32>
    %69 = arith.addf %67, %68 : vector<8x256xf32>
    %cst_53 = arith.constant 0.000000e+00 : f32
    %70 = vector.broadcast %cst_53 : f32 to vector<8x256xf32>
    %71 = arith.maximumf %69, %70 : vector<8x256xf32>
    %72 = arith.truncf %71 : vector<8x256xf32> to vector<8x256xbf16>
    %c0_54 = arith.constant 0 : index
    %c0_55 = arith.constant 0 : index
    %73 = vector.load %arg20[%c0_54, %c0_55] : memref<256x384xbf16, #tpu.memory_space<vmem>>, vector<256x384xbf16>
    %c0_56 = arith.constant 0 : index
    %c0_57 = arith.constant 0 : index
    %74 = vector.load %arg21[%c0_56, %c0_57] : memref<1x384xf32, #tpu.memory_space<vmem>>, vector<1x384xf32>
    %cst_58 = arith.constant dense<0.000000e+00> : vector<8x384xf32>
    %75 = tpu.matmul %72, %73, %cst_58 {dimension_numbers = #tpu.dot_dimension_numbers<[1], [0], [0], [1], [0, 0, 1, 1], [], []>} : vector<8x256xbf16>, vector<256x384xbf16>, vector<8x384xf32> -> vector<8x384xf32>
    %76 = vector.broadcast %74 : vector<1x384xf32> to vector<8x384xf32>
    %77 = arith.addf %75, %76 : vector<8x384xf32>
    %cst_59 = arith.constant 0.000000e+00 : f32
    %78 = vector.broadcast %cst_59 : f32 to vector<8x384xf32>
    %79 = arith.subf %78, %77 : vector<8x384xf32>
    %80 = math.exp %79 : vector<8x384xf32>
    %cst_60 = arith.constant 1.000000e+00 : f32
    %81 = vector.broadcast %cst_60 : f32 to vector<8x384xf32>
    %82 = arith.addf %81, %80 : vector<8x384xf32>
    %83 = tpu.reciprocal %82 {approx = true} : vector<8x384xf32> -> vector<8x384xf32>
    %c0_61 = arith.constant 0 : index
    %c0_62 = arith.constant 0 : index
    %84 = vector.load %arg22[%c0_61, %c0_62] : memref<8x384xf32, #tpu.memory_space<vmem>>, vector<8x384xf32>
    tpu.vector_store %arg22[%c0_61, %c0_62], %83 {strides = array<i32>} : memref<8x384xf32, #tpu.memory_space<vmem>>, vector<8x384xf32>,
    return
  }
  func.func @transform_0(%arg0: i32) -> (i32, i32) {
    %c0_i32 = arith.constant 0 : i32
    %c0_i32_0 = arith.constant 0 : i32
    return %arg0, %c0_i32 : i32, i32
  }
  func.func @transform_1(%arg0: i32) -> (i32, i32) {
    %c0_i32 = arith.constant 0 : i32
    %c0_i32_0 = arith.constant 0 : i32
    %c0_i32_1 = arith.constant 0 : i32
    return %c0_i32, %c0_i32_0 : i32, i32
  }
  func.func @transform_2(%arg0: i32) -> (i32, i32) {
    %c0_i32 = arith.constant 0 : i32
    %c0_i32_0 = arith.constant 0 : i32
    %c0_i32_1 = arith.constant 0 : i32
    return %c0_i32, %c0_i32_0 : i32, i32
  }
  func.func @transform_3(%arg0: i32) -> (i32, i32) {
    %c0_i32 = arith.constant 0 : i32
    %c0_i32_0 = arith.constant 0 : i32
    %c0_i32_1 = arith.constant 0 : i32
    return %c0_i32, %c0_i32_0 : i32, i32
  }
  func.func @transform_4(%arg0: i32) -> (i32, i32) {
    %c0_i32 = arith.constant 0 : i32
    %c0_i32_0 = arith.constant 0 : i32
    %c0_i32_1 = arith.constant 0 : i32
    return %c0_i32, %c0_i32_0 : i32, i32
  }
  func.func @transform_5(%arg0: i32) -> (i32, i32) {
    %c0_i32 = arith.constant 0 : i32
    %c0_i32_0 = arith.constant 0 : i32
    %c0_i32_1 = arith.constant 0 : i32
    return %c0_i32, %c0_i32_0 : i32, i32
  }
  func.func @transform_6(%arg0: i32) -> (i32, i32) {
    %c0_i32 = arith.constant 0 : i32
    %c0_i32_0 = arith.constant 0 : i32
    %c0_i32_1 = arith.constant 0 : i32
    return %c0_i32, %c0_i32_0 : i32, i32
  }
  func.func @transform_7(%arg0: i32) -> (i32, i32) {
    %c0_i32 = arith.constant 0 : i32
    %c0_i32_0 = arith.constant 0 : i32
    %c0_i32_1 = arith.constant 0 : i32
    return %c0_i32, %c0_i32_0 : i32, i32
  }
  func.func @transform_8(%arg0: i32) -> (i32, i32) {
    %c0_i32 = arith.constant 0 : i32
    %c0_i32_0 = arith.constant 0 : i32
    %c0_i32_1 = arith.constant 0 : i32
    return %c0_i32, %c0_i32_0 : i32, i32
  }
  func.func @transform_9(%arg0: i32) -> (i32, i32) {
    %c0_i32 = arith.constant 0 : i32
    %c0_i32_0 = arith.constant 0 : i32
    %c0_i32_1 = arith.constant 0 : i32
    return %c0_i32, %c0_i32_0 : i32, i32
  }
  func.func @transform_10(%arg0: i32) -> (i32, i32) {
    %c0_i32 = arith.constant 0 : i32
    %c0_i32_0 = arith.constant 0 : i32
    %c0_i32_1 = arith.constant 0 : i32
    return %c0_i32, %c0_i32_0 : i32, i32
  }
  func.func @transform_11(%arg0: i32) -> (i32, i32) {
    %c0_i32 = arith.constant 0 : i32
    %c0_i32_0 = arith.constant 0 : i32
    %c0_i32_1 = arith.constant 0 : i32
    return %c0_i32, %c0_i32_0 : i32, i32
  }
  func.func @transform_12(%arg0: i32) -> (i32, i32) {
    %c0_i32 = arith.constant 0 : i32
    %c0_i32_0 = arith.constant 0 : i32
    %c0_i32_1 = arith.constant 0 : i32
    return %c0_i32, %c0_i32_0 : i32, i32
  }
  func.func @transform_13(%arg0: i32) -> (i32, i32) {
    %c0_i32 = arith.constant 0 : i32
    %c0_i32_0 = arith.constant 0 : i32
    %c0_i32_1 = arith.constant 0 : i32
    return %c0_i32, %c0_i32_0 : i32, i32
  }
  func.func @transform_14(%arg0: i32) -> (i32, i32) {
    %c0_i32 = arith.constant 0 : i32
    %c0_i32_0 = arith.constant 0 : i32
    %c0_i32_1 = arith.constant 0 : i32
    return %c0_i32, %c0_i32_0 : i32, i32
  }
  func.func @transform_15(%arg0: i32) -> (i32, i32) {
    %c0_i32 = arith.constant 0 : i32
    %c0_i32_0 = arith.constant 0 : i32
    %c0_i32_1 = arith.constant 0 : i32
    return %c0_i32, %c0_i32_0 : i32, i32
  }
  func.func @transform_16(%arg0: i32) -> (i32, i32) {
    %c0_i32 = arith.constant 0 : i32
    %c0_i32_0 = arith.constant 0 : i32
    %c0_i32_1 = arith.constant 0 : i32
    return %c0_i32, %c0_i32_0 : i32, i32
  }
  func.func @transform_17(%arg0: i32) -> (i32, i32) {
    %c0_i32 = arith.constant 0 : i32
    %c0_i32_0 = arith.constant 0 : i32
    %c0_i32_1 = arith.constant 0 : i32
    return %c0_i32, %c0_i32_0 : i32, i32
  }
  func.func @transform_18(%arg0: i32) -> (i32, i32) {
    %c0_i32 = arith.constant 0 : i32
    %c0_i32_0 = arith.constant 0 : i32
    %c0_i32_1 = arith.constant 0 : i32
    return %c0_i32, %c0_i32_0 : i32, i32
  }
  func.func @transform_19(%arg0: i32) -> (i32, i32) {
    %c0_i32 = arith.constant 0 : i32
    %c0_i32_0 = arith.constant 0 : i32
    %c0_i32_1 = arith.constant 0 : i32
    return %c0_i32, %c0_i32_0 : i32, i32
  }
  func.func @transform_20(%arg0: i32) -> (i32, i32) {
    %c0_i32 = arith.constant 0 : i32
    %c0_i32_0 = arith.constant 0 : i32
    %c0_i32_1 = arith.constant 0 : i32
    return %c0_i32, %c0_i32_0 : i32, i32
  }
  func.func @transform_21(%arg0: i32) -> (i32, i32) {
    %c0_i32 = arith.constant 0 : i32
    %c0_i32_0 = arith.constant 0 : i32
    return %arg0, %c0_i32 : i32, i32
  }
}

</mosaic_0001>

<llo_original>
// kernel: network_forward.1
$region0: #{network_forward.1}
  #allocation0 [shape = 'u32[]', space=smem, size = 0x4, offset = 0x4, fixed_abs, tag = 'smem constant byte address 0x4 - core index']
  #allocation1 [shape = 'u32[144,128]{1,0:T(1,128)}', space=vmem, size = 0x12000, scoped, tag = 'internal scratch']
  %s0 = inlined_call_operand.vmem [shape: bf16[8,384], index: 0, kind: input, shape index: {}]
  %s1 = inlined_call_operand.vmem [shape: bf16[384,256], index: 1, kind: input, shape index: {}]
  %s2 = inlined_call_operand.vmem [shape: f32[1,256], index: 2, kind: input, shape index: {}]
  %s3 = inlined_call_operand.vmem [shape: bf16[256,128], index: 3, kind: input, shape index: {}]
  %s4 = inlined_call_operand.vmem [shape: f32[1,128], index: 4, kind: input, shape index: {}]
  %s5 = inlined_call_operand.vmem [shape: bf16[128,128], index: 5, kind: input, shape index: {}]
  %s6 = inlined_call_operand.vmem [shape: f32[1,128], index: 6, kind: input, shape index: {}]
  %s7 = inlined_call_operand.vmem [shape: bf16[128,128], index: 7, kind: input, shape index: {}]
  %s8 = inlined_call_operand.vmem [shape: f32[1,128], index: 8, kind: input, shape index: {}]
  %s9 = inlined_call_operand.vmem [shape: bf16[128,128], index: 9, kind: input, shape index: {}]
  %s10 = inlined_call_operand.vmem [shape: f32[1,128], index: 10, kind: input, shape index: {}]
  %s11 = inlined_call_operand.vmem [shape: bf16[128,128], index: 11, kind: input, shape index: {}]
  %s12 = inlined_call_operand.vmem [shape: f32[1,128], index: 12, kind: input, shape index: {}]
  %s13 = inlined_call_operand.vmem [shape: bf16[128,128], index: 13, kind: input, shape index: {}]
  %s14 = inlined_call_operand.vmem [shape: f32[1,128], index: 14, kind: input, shape index: {}]
  %s15 = inlined_call_operand.vmem [shape: bf16[128,128], index: 15, kind: input, shape index: {}]
  %s16 = inlined_call_operand.vmem [shape: f32[1,128], index: 16, kind: input, shape index: {}]
  %s17 = inlined_call_operand.vmem [shape: bf16[128,256], index: 17, kind: input, shape index: {}]
  %s18 = inlined_call_operand.vmem [shape: f32[1,256], index: 18, kind: input, shape index: {}]
  %s19 = inlined_call_operand.vmem [shape: bf16[256,384], index: 19, kind: input, shape index: {}]
  %s20 = inlined_call_operand.vmem [shape: f32[1,384], index: 20, kind: input, shape index: {}]
  %s21 = inlined_call_operand.hbm [shape: f32[8,384], index: 21, kind: output, shape index: {}]
  %s22 = sld [smem:[#allocation0]]
  $region94: #{network_forward.1} parent=0
    _
  %s24 = ssub.s32 1, %s22
  %s25 = scalar_select 0, %s24, %s22
  $region1: #{network_forward.1} parent=0
    #allocation2 [shape = 'u8[12288]{0}', space=vmem, size = 0x3000, scoped, tag = 'output window, operand 0, single buffered']
    #allocation3 [shape = 's32[1]{0}', space=sflag, size = 0x4, scoped, tag = 'scoped memory for network_forward.1']
    %26 = vsyncpa [#allocation3], 0
    // Predicated region
    $region2: #{network_forward.1} parent=1 // pred_check
      _
    $region3: #{network_forward.1} parent=1 // pred_check_branch
      %28 = sbr.rel (0) target = $region5
    $region4: #{network_forward.1} parent=1 // pred_region
      _
    $region5: #{network_forward.1} parent=1 // pred_fallthru
      _
    // Predicated region
    $region6: #{network_forward.1} parent=1 // pred_check
      _
    $region7: #{network_forward.1} parent=1 // pred_check_branch
      %30 = sbr.rel (0) target = $region9
    $region8: #{network_forward.1} parent=1 // pred_region
      _
    $region9: #{network_forward.1} parent=1 // pred_fallthru
      _
    // Predicated region
    $region10: #{network_forward.1} parent=1 // pred_check
      _
    $region11: #{network_forward.1} parent=1 // pred_check_branch
      %32 = sbr.rel (0) target = $region13
    $region12: #{network_forward.1} parent=1 // pred_region
      _
    $region13: #{network_forward.1} parent=1 // pred_fallthru
      _
    // Predicated region
    $region14: #{network_forward.1} parent=1 // pred_check
      _
    $region15: #{network_forward.1} parent=1 // pred_check_branch
      %34 = sbr.rel (0) target = $region17
    $region16: #{network_forward.1} parent=1 // pred_region
      _
    $region17: #{network_forward.1} parent=1 // pred_fallthru
      _
    // Predicated region
    $region18: #{network_forward.1} parent=1 // pred_check
      _
    $region19: #{network_forward.1} parent=1 // pred_check_branch
      %36 = sbr.rel (0) target = $region21
    $region20: #{network_forward.1} parent=1 // pred_region
      _
    $region21: #{network_forward.1} parent=1 // pred_fallthru
      _
    // Predicated region
    $region22: #{network_forward.1} parent=1 // pred_check
      _
    $region23: #{network_forward.1} parent=1 // pred_check_branch
      %38 = sbr.rel (0) target = $region25
    $region24: #{network_forward.1} parent=1 // pred_region
      _
    $region25: #{network_forward.1} parent=1 // pred_fallthru
      _
    // Predicated region
    $region26: #{network_forward.1} parent=1 // pred_check
      _
    $region27: #{network_forward.1} parent=1 // pred_check_branch
      %40 = sbr.rel (0) target = $region29
    $region28: #{network_forward.1} parent=1 // pred_region
      _
    $region29: #{network_forward.1} parent=1 // pred_fallthru
      _
    // Predicated region
    $region30: #{network_forward.1} parent=1 // pred_check
      _
    $region31: #{network_forward.1} parent=1 // pred_check_branch
      %42 = sbr.rel (0) target = $region33
    $region32: #{network_forward.1} parent=1 // pred_region
      _
    $region33: #{network_forward.1} parent=1 // pred_fallthru
      _
    // Predicated region
    $region34: #{network_forward.1} parent=1 // pred_check
      _
    $region35: #{network_forward.1} parent=1 // pred_check_branch
      %44 = sbr.rel (0) target = $region37
    $region36: #{network_forward.1} parent=1 // pred_region
      _
    $region37: #{network_forward.1} parent=1 // pred_fallthru
      _
    // Predicated region
    $region38: #{network_forward.1} parent=1 // pred_check
      _
    $region39: #{network_forward.1} parent=1 // pred_check_branch
      %46 = sbr.rel (0) target = $region41
    $region40: #{network_forward.1} parent=1 // pred_region
      _
    $region41: #{network_forward.1} parent=1 // pred_fallthru
      _
    // Predicated region
    $region42: #{network_forward.1} parent=1 // pred_check
      _
    $region43: #{network_forward.1} parent=1 // pred_check_branch
      %48 = sbr.rel (0) target = $region45
    $region44: #{network_forward.1} parent=1 // pred_region
      _
    $region45: #{network_forward.1} parent=1 // pred_fallthru
      _
    // Predicated region
    $region46: #{network_forward.1} parent=1 // pred_check
      _
    $region47: #{network_forward.1} parent=1 // pred_check_branch
      %50 = sbr.rel (0) target = $region49
    $region48: #{network_forward.1} parent=1 // pred_region
      _
    $region49: #{network_forward.1} parent=1 // pred_fallthru
      _
    // Predicated region
    $region50: #{network_forward.1} parent=1 // pred_check
      _
    $region51: #{network_forward.1} parent=1 // pred_check_branch
      %52 = sbr.rel (0) target = $region53
    $region52: #{network_forward.1} parent=1 // pred_region
      _
    $region53: #{network_forward.1} parent=1 // pred_fallthru
      _
    // Predicated region
    $region54: #{network_forward.1} parent=1 // pred_check
      _
    $region55: #{network_forward.1} parent=1 // pred_check_branch
      %54 = sbr.rel (0) target = $region57
    $region56: #{network_forward.1} parent=1 // pred_region
      _
    $region57: #{network_forward.1} parent=1 // pred_fallthru
      _
    // Predicated region
    $region58: #{network_forward.1} parent=1 // pred_check
      _
    $region59: #{network_forward.1} parent=1 // pred_check_branch
      %56 = sbr.rel (0) target = $region61
    $region60: #{network_forward.1} parent=1 // pred_region
      _
    $region61: #{network_forward.1} parent=1 // pred_fallthru
      _
    // Predicated region
    $region62: #{network_forward.1} parent=1 // pred_check
      _
    $region63: #{network_forward.1} parent=1 // pred_check_branch
      %58 = sbr.rel (0) target = $region65
    $region64: #{network_forward.1} parent=1 // pred_region
      _
    $region65: #{network_forward.1} parent=1 // pred_fallthru
      _
    // Predicated region
    $region66: #{network_forward.1} parent=1 // pred_check
      _
    $region67: #{network_forward.1} parent=1 // pred_check_branch
      %60 = sbr.rel (0) target = $region69
    $region68: #{network_forward.1} parent=1 // pred_region
      _
    $region69: #{network_forward.1} parent=1 // pred_fallthru
      _
    // Predicated region
    $region70: #{network_forward.1} parent=1 // pred_check
      _
    $region71: #{network_forward.1} parent=1 // pred_check_branch
      %62 = sbr.rel (0) target = $region73
    $region72: #{network_forward.1} parent=1 // pred_region
      _
    $region73: #{network_forward.1} parent=1 // pred_fallthru
      _
    // Predicated region
    $region74: #{network_forward.1} parent=1 // pred_check
      _
    $region75: #{network_forward.1} parent=1 // pred_check_branch
      %64 = sbr.rel (0) target = $region77
    $region76: #{network_forward.1} parent=1 // pred_region
      _
    $region77: #{network_forward.1} parent=1 // pred_fallthru
      _
    // Predicated region
    $region78: #{network_forward.1} parent=1 // pred_check
      _
    $region79: #{network_forward.1} parent=1 // pred_check_branch
      %66 = sbr.rel (0) target = $region81
    $region80: #{network_forward.1} parent=1 // pred_region
      _
    $region81: #{network_forward.1} parent=1 // pred_fallthru
      _
    // Predicated region
    $region82: #{network_forward.1} parent=1 // pred_check
      _
    $region83: #{network_forward.1} parent=1 // pred_check_branch
      %68 = sbr.rel (0) target = $region85
    $region84: #{network_forward.1} parent=1 // pred_region
      _
    $region85: #{network_forward.1} parent=1 // pred_fallthru
      _
    %v70 = vld [vmem:[%s0] sm:$0xff]
    %v71 = vld [vmem:[%s0 + $0x8] sm:$0xf]
    %v72 = vld [vmem:[%s1] sm:$0xff]
    %v73 = vld [vmem:[%s1 + $0x8] sm:$0xff]
    %v74 = vld [vmem:[%s1 + $0x10] sm:$0xff]
    %v75 = vld [vmem:[%s1 + $0x18] sm:$0xff]
    %v76 = vld [vmem:[%s1 + $0x20] sm:$0xff]
    %v77 = vld [vmem:[%s1 + $0x28] sm:$0xff]
    %v78 = vld [vmem:[%s1 + $0x30] sm:$0xff]
    %v79 = vld [vmem:[%s1 + $0x38] sm:$0xff]
    %v80 = vld [vmem:[%s1 + $0x40] sm:$0xff]
    %v81 = vld [vmem:[%s1 + $0x48] sm:$0xff]
    %v82 = vld [vmem:[%s1 + $0x50] sm:$0xff]
    %v83 = vld [vmem:[%s1 + $0x58] sm:$0xff]
    %v84 = vld [vmem:[%s1 + $0x60] sm:$0xff]
    %v85 = vld [vmem:[%s1 + $0x68] sm:$0xff]
    %v86 = vld [vmem:[%s1 + $0x70] sm:$0xff]
    %v87 = vld [vmem:[%s1 + $0x78] sm:$0xff]
    %v88 = vld [vmem:[%s1 + $0x80] sm:$0xff]
    %v89 = vld [vmem:[%s1 + $0x88] sm:$0xff]
    %v90 = vld [vmem:[%s1 + $0x90] sm:$0xff]
    %v91 = vld [vmem:[%s1 + $0x98] sm:$0xff]
    %v92 = vld [vmem:[%s1 + $0xa0] sm:$0xff]
    %v93 = vld [vmem:[%s1 + $0xa8] sm:$0xff]
    %v94 = vld [vmem:[%s1 + $0xb0] sm:$0xff]
    %v95 = vld [vmem:[%s1 + $0xb8] sm:$0xff]
    %v96 = vld [vmem:[%s1 + $0xc0] sm:$0xff]
    %v97 = vld [vmem:[%s1 + $0xc8] sm:$0xff]
    %v98 = vld [vmem:[%s1 + $0xd0] sm:$0xff]
    %v99 = vld [vmem:[%s1 + $0xd8] sm:$0xff]
    %v100 = vld [vmem:[%s1 + $0xe0] sm:$0xff]
    %v101 = vld [vmem:[%s1 + $0xe8] sm:$0xff]
    %v102 = vld [vmem:[%s1 + $0xf0] sm:$0xff]
    %v103 = vld [vmem:[%s1 + $0xf8] sm:$0xff]
    %v104 = vld [vmem:[%s1 + $0x100] sm:$0xff]
    %v105 = vld [vmem:[%s1 + $0x108] sm:$0xff]
    %v106 = vld [vmem:[%s1 + $0x110] sm:$0xff]
    %v107 = vld [vmem:[%s1 + $0x118] sm:$0xff]
    %v108 = vld [vmem:[%s1 + $0x120] sm:$0xff]
    %v109 = vld [vmem:[%s1 + $0x128] sm:$0xff]
    %v110 = vld [vmem:[%s1 + $0x130] sm:$0xff]
    %v111 = vld [vmem:[%s1 + $0x138] sm:$0xff]
    %v112 = vld [vmem:[%s1 + $0x140] sm:$0xff]
    %v113 = vld [vmem:[%s1 + $0x148] sm:$0xff]
    %v114 = vld [vmem:[%s1 + $0x150] sm:$0xff]
    %v115 = vld [vmem:[%s1 + $0x158] sm:$0xff]
    %v116 = vld [vmem:[%s1 + $0x160] sm:$0xff]
    %v117 = vld [vmem:[%s1 + $0x168] sm:$0xff]
    %v118 = vld [vmem:[%s1 + $0x170] sm:$0xff]
    %v119 = vld [vmem:[%s1 + $0x178] sm:$0xff]
    %v120 = vld [vmem:[%s2] sm:$0x3]
    %v122 = vlaneseq
    %v123 = vshrl.u32 %v122, 7
    %v124 = vsub.s32 0, %v123
    %v125 = vrot.slane %v120, %v124
    %v126 = vlaneseq
    %v127 = vshrl.u32 %v126, 7
    %v128 = vsub.s32 1, %v127
    %v129 = vrot.slane %v120, %v128
    %v134 = vunpack.c.l.b16 %v70
    %v135 = vunpack.c.h.b16 %v70
    %v136 = vunpack.c.l.b16 %v71
    %v137 = vpack.c.b16 %v134, %v134
    %v138 = vpack.c.b16 %v135, %v135
    %v139 = vpack.c.b16 %v136, %v136
    %v191 = vunpack.c.l.b16 %v72
    %v192 = vunpack.c.h.b16 %v72
    %v193 = vunpack.c.l.b16 %v73
    %v194 = vunpack.c.h.b16 %v73
    %v195 = vunpack.c.l.b16 %v74
    %v196 = vunpack.c.h.b16 %v74
    %v197 = vunpack.c.l.b16 %v75
    %v198 = vunpack.c.h.b16 %v75
    %v199 = vunpack.c.l.b16 %v76
    %v200 = vunpack.c.h.b16 %v76
    %v201 = vunpack.c.l.b16 %v77
    %v202 = vunpack.c.h.b16 %v77
    %v203 = vunpack.c.l.b16 %v78
    %v204 = vunpack.c.h.b16 %v78
    %v205 = vunpack.c.l.b16 %v79
    %v206 = vunpack.c.h.b16 %v79
    %v207 = vunpack.c.l.b16 %v80
    %v208 = vunpack.c.h.b16 %v80
    %v209 = vunpack.c.l.b16 %v81
    %v210 = vunpack.c.h.b16 %v81
    %v211 = vunpack.c.l.b16 %v82
    %v212 = vunpack.c.h.b16 %v82
    %v213 = vunpack.c.l.b16 %v83
    %v214 = vunpack.c.h.b16 %v83
    %v215 = vunpack.c.l.b16 %v84
    %v216 = vunpack.c.h.b16 %v84
    %v217 = vunpack.c.l.b16 %v85
    %v218 = vunpack.c.h.b16 %v85
    %v219 = vunpack.c.l.b16 %v86
    %v220 = vunpack.c.h.b16 %v86
    %v221 = vunpack.c.l.b16 %v87
    %v222 = vunpack.c.h.b16 %v87
    %v223 = vunpack.c.l.b16 %v88
    %v224 = vunpack.c.h.b16 %v88
    %v225 = vunpack.c.l.b16 %v89
    %v226 = vunpack.c.h.b16 %v89
    %v227 = vunpack.c.l.b16 %v90
    %v228 = vunpack.c.h.b16 %v90
    %v229 = vunpack.c.l.b16 %v91
    %v230 = vunpack.c.h.b16 %v91
    %v231 = vunpack.c.l.b16 %v92
    %v232 = vunpack.c.h.b16 %v92
    %v233 = vunpack.c.l.b16 %v93
    %v234 = vunpack.c.h.b16 %v93
    %v235 = vunpack.c.l.b16 %v94
    %v236 = vunpack.c.h.b16 %v94
    %v237 = vunpack.c.l.b16 %v95
    %v238 = vunpack.c.h.b16 %v95
    %v239 = vunpack.c.l.b16 %v96
    %v240 = vunpack.c.h.b16 %v96
    %v241 = vunpack.c.l.b16 %v97
    %v242 = vunpack.c.h.b16 %v97
    %v243 = vunpack.c.l.b16 %v98
    %v244 = vunpack.c.h.b16 %v98
    %v245 = vunpack.c.l.b16 %v99
    %v246 = vunpack.c.h.b16 %v99
    %v247 = vunpack.c.l.b16 %v100
    %v248 = vunpack.c.h.b16 %v100
    %v249 = vunpack.c.l.b16 %v101
    %v250 = vunpack.c.h.b16 %v101
    %v251 = vunpack.c.l.b16 %v102
    %v252 = vunpack.c.h.b16 %v102
    %v253 = vunpack.c.l.b16 %v103
    %v254 = vunpack.c.h.b16 %v103
    %v255 = vunpack.c.l.b16 %v104
    %v256 = vunpack.c.h.b16 %v104
    %v257 = vunpack.c.l.b16 %v105
    %v258 = vunpack.c.h.b16 %v105
    %v259 = vunpack.c.l.b16 %v106
    %v260 = vunpack.c.h.b16 %v106
    %v261 = vunpack.c.l.b16 %v107
    %v262 = vunpack.c.h.b16 %v107
    %v263 = vunpack.c.l.b16 %v108
    %v264 = vunpack.c.h.b16 %v108
    %v265 = vunpack.c.l.b16 %v109
    %v266 = vunpack.c.h.b16 %v109
    %v267 = vunpack.c.l.b16 %v110
    %v268 = vunpack.c.h.b16 %v110
    %v269 = vunpack.c.l.b16 %v111
    %v270 = vunpack.c.h.b16 %v111
    %v271 = vunpack.c.l.b16 %v112
    %v272 = vunpack.c.h.b16 %v112
    %v273 = vunpack.c.l.b16 %v113
    %v274 = vunpack.c.h.b16 %v113
    %v275 = vunpack.c.l.b16 %v114
    %v276 = vunpack.c.h.b16 %v114
    %v277 = vunpack.c.l.b16 %v115
    %v278 = vunpack.c.h.b16 %v115
    %v279 = vunpack.c.l.b16 %v116
    %v280 = vunpack.c.h.b16 %v116
    %v281 = vunpack.c.l.b16 %v117
    %v282 = vunpack.c.h.b16 %v117
    %v283 = vunpack.c.l.b16 %v118
    %v284 = vunpack.c.h.b16 %v118
    %v285 = vunpack.c.l.b16 %v119
    %v286 = vunpack.c.h.b16 %v119
    %v287 = vpack.c.b16 %v193, %v191
    %v288 = vpack.c.b16 %v194, %v192
    %v289 = vpack.c.b16 %v197, %v195
    %v290 = vpack.c.b16 %v198, %v196
    %v291 = vpack.c.b16 %v201, %v199
    %v292 = vpack.c.b16 %v202, %v200
    %v293 = vpack.c.b16 %v205, %v203
    %v294 = vpack.c.b16 %v206, %v204
    %v295 = vpack.c.b16 %v209, %v207
    %v296 = vpack.c.b16 %v210, %v208
    %v297 = vpack.c.b16 %v213, %v211
    %v298 = vpack.c.b16 %v214, %v212
    %v299 = vpack.c.b16 %v217, %v215
    %v300 = vpack.c.b16 %v218, %v216
    %v301 = vpack.c.b16 %v221, %v219
    %v302 = vpack.c.b16 %v222, %v220
    %v303 = vpack.c.b16 %v225, %v223
    %v304 = vpack.c.b16 %v226, %v224
    %v305 = vpack.c.b16 %v229, %v227
    %v306 = vpack.c.b16 %v230, %v228
    %v307 = vpack.c.b16 %v233, %v231
    %v308 = vpack.c.b16 %v234, %v232
    %v309 = vpack.c.b16 %v237, %v235
    %v310 = vpack.c.b16 %v238, %v236
    %v311 = vpack.c.b16 %v241, %v239
    %v312 = vpack.c.b16 %v242, %v240
    %v313 = vpack.c.b16 %v245, %v243
    %v314 = vpack.c.b16 %v246, %v244
    %v315 = vpack.c.b16 %v249, %v247
    %v316 = vpack.c.b16 %v250, %v248
    %v317 = vpack.c.b16 %v253, %v251
    %v318 = vpack.c.b16 %v254, %v252
    %v319 = vpack.c.b16 %v257, %v255
    %v320 = vpack.c.b16 %v258, %v256
    %v321 = vpack.c.b16 %v261, %v259
    %v322 = vpack.c.b16 %v262, %v260
    %v323 = vpack.c.b16 %v265, %v263
    %v324 = vpack.c.b16 %v266, %v264
    %v325 = vpack.c.b16 %v269, %v267
    %v326 = vpack.c.b16 %v270, %v268
    %v327 = vpack.c.b16 %v273, %v271
    %v328 = vpack.c.b16 %v274, %v272
    %v329 = vpack.c.b16 %v277, %v275
    %v330 = vpack.c.b16 %v278, %v276
    %v331 = vpack.c.b16 %v281, %v279
    %v332 = vpack.c.b16 %v282, %v280
    %v333 = vpack.c.b16 %v285, %v283
    %v334 = vpack.c.b16 %v286, %v284
    %383 = vmatprep.subr.bf16.mxu0 %v302
    %384 = vmatpush1.bf16.msra.mxu0 %v301
    %385 = vmatprep.subr.bf16.mxu0 %v300
    %386 = vmatpush1.bf16.msra.mxu0 %v299
    %387 = vmatprep.subr.bf16.mxu0 %v298
    %388 = vmatpush1.bf16.msra.mxu0 %v297
    %389 = vmatprep.subr.bf16.mxu0 %v296
    %390 = vmatpush1.bf16.msra.mxu0 %v295
    %391 = vmatprep.subr.bf16.mxu0 %v294
    %392 = vmatpush1.bf16.msra.mxu0 %v293
    %393 = vmatprep.subr.bf16.mxu0 %v292
    %394 = vmatpush1.bf16.msra.mxu0 %v291
    %395 = vmatprep.subr.bf16.mxu0 %v290
    %396 = vmatpush1.bf16.msra.mxu0 %v289
    %397 = vmatprep.subr.bf16.mxu0 %v288
    %398 = vmatpush1.bf16.msra.mxu0 %v287
    %399 = vmatprep.subr.bf16.mxu0 %v318
    %400 = vmatpush2.bf16.msra.mxu0 %v317
    %401 = vmatprep.subr.bf16.mxu0 %v316
    %402 = vmatpush2.bf16.msra.mxu0 %v315
    %403 = vmatprep.subr.bf16.mxu0 %v314
    %404 = vmatpush2.bf16.msra.mxu0 %v313
    %405 = vmatprep.subr.bf16.mxu0 %v312
    %406 = vmatpush2.bf16.msra.mxu0 %v311
    %407 = vmatprep.subr.bf16.mxu0 %v310
    %408 = vmatpush2.bf16.msra.mxu0 %v309
    %409 = vmatprep.subr.bf16.mxu0 %v308
    %410 = vmatpush2.bf16.msra.mxu0 %v307
    %411 = vmatprep.subr.bf16.mxu0 %v306
    %412 = vmatpush2.bf16.msra.mxu0 %v305
    %413 = vmatprep.subr.bf16.mxu0 %v304
    %414 = vmatpush2.bf16.msra.mxu0 %v303
    %415 = vmatprep.mubr.bf16.mxu0 %v138
    %416 = vmatmul.mubr.bf16.gmra.mxu0 %v137
    %v417 = vpop.f32.mrf.mxu0
    %v418 = vadd.f32 %v125, %v417
    %v419 = vpop.f32.mrf.mxu0
    %v420 = vadd.f32 %v129, %v419
    %v421 = vpop.f32.mrf.mxu0
    %v422 = vpop.f32.mrf.mxu0
    %423 = vdwg.mxu0
    %424 = vmatprep.subr.bf16.mxu0 %v334
    %425 = vmatpush1.bf16.msra.mxu0 %v333
    %426 = vmatprep.subr.bf16.mxu0 %v332
    %427 = vmatpush1.bf16.msra.mxu0 %v331
    %428 = vmatprep.subr.bf16.mxu0 %v330
    %429 = vmatpush1.bf16.msra.mxu0 %v329
    %430 = vmatprep.subr.bf16.mxu0 %v328
    %431 = vmatpush1.bf16.msra.mxu0 %v327
    %432 = vmatprep.subr.bf16.mxu0 %v326
    %433 = vmatpush1.bf16.msra.mxu0 %v325
    %434 = vmatprep.subr.bf16.mxu0 %v324
    %435 = vmatpush1.bf16.msra.mxu0 %v323
    %436 = vmatprep.subr.bf16.mxu0 %v322
    %437 = vmatpush1.bf16.msra.mxu0 %v321
    %438 = vmatprep.subr.bf16.mxu0 %v320
    %439 = vmatpush1.bf16.msra.mxu0 %v319
    %440 = vmatprep.subr.bf16.mxu0 0
    %441 = vmatpush2.bf16.msra.mxu0 0
    %442 = vmatprep.subr.bf16.mxu0 0
    %443 = vmatpush2.bf16.msra.mxu0 0
    %444 = vmatprep.subr.bf16.mxu0 0
    %445 = vmatpush2.bf16.msra.mxu0 0
    %446 = vmatprep.subr.bf16.mxu0 0
    %447 = vmatpush2.bf16.msra.mxu0 0
    %448 = vmatprep.subr.bf16.mxu0 0
    %449 = vmatpush2.bf16.msra.mxu0 0
    %450 = vmatprep.subr.bf16.mxu0 0
    %451 = vmatpush2.bf16.msra.mxu0 0
    %452 = vmatprep.subr.bf16.mxu0 0
    %453 = vmatpush2.bf16.msra.mxu0 0
    %454 = vmatprep.subr.bf16.mxu0 0
    %455 = vmatpush2.bf16.msra.mxu0 0
    %456 = vmatprep.mubr.bf16.mxu0 0
    %457 = vmatmul.mubr.bf16.gmra.mxu0 %v139
    %v458 = vpop.f32.mrf.mxu0
    %v459 = vadd.f32 %v418, %v458
    %v460 = vpop.f32.mrf.mxu0
    %v461 = vadd.f32 %v420, %v460
    %v462 = vpop.f32.mrf.mxu0
    %v463 = vpop.f32.mrf.mxu0
    %464 = vdwg.mxu0
    %v465 = vmax.f32 %v459, 0.0
    %v466 = vmax.f32 %v461, 0.0
    %v467 = vpack.c.bf16 %v465, %v465
    %v468 = vpack.c.bf16 %v466, %v466
    %v469 = vld [vmem:[%s3] sm:$0xf]
    %v470 = vld [vmem:[%s3 + $0x4] sm:$0xf]
    %v471 = vld [vmem:[%s3 + $0x8] sm:$0xf]
    %v472 = vld [vmem:[%s3 + $0xc] sm:$0xf]
    %v473 = vld [vmem:[%s3 + $0x10] sm:$0xf]
    %v474 = vld [vmem:[%s3 + $0x14] sm:$0xf]
    %v475 = vld [vmem:[%s3 + $0x18] sm:$0xf]
    %v476 = vld [vmem:[%s3 + $0x1c] sm:$0xf]
    %v477 = vld [vmem:[%s3 + $0x20] sm:$0xf]
    %v478 = vld [vmem:[%s3 + $0x24] sm:$0xf]
    %v479 = vld [vmem:[%s3 + $0x28] sm:$0xf]
    %v480 = vld [vmem:[%s3 + $0x2c] sm:$0xf]
    %v481 = vld [vmem:[%s3 + $0x30] sm:$0xf]
    %v482 = vld [vmem:[%s3 + $0x34] sm:$0xf]
    %v483 = vld [vmem:[%s3 + $0x38] sm:$0xf]
    %v484 = vld [vmem:[%s3 + $0x3c] sm:$0xf]
    %v485 = vld [vmem:[%s3 + $0x40] sm:$0xf]
    %v486 = vld [vmem:[%s3 + $0x44] sm:$0xf]
    %v487 = vld [vmem:[%s3 + $0x48] sm:$0xf]
    %v488 = vld [vmem:[%s3 + $0x4c] sm:$0xf]
    %v489 = vld [vmem:[%s3 + $0x50] sm:$0xf]
    %v490 = vld [vmem:[%s3 + $0x54] sm:$0xf]
    %v491 = vld [vmem:[%s3 + $0x58] sm:$0xf]
    %v492 = vld [vmem:[%s3 + $0x5c] sm:$0xf]
    %v493 = vld [vmem:[%s3 + $0x60] sm:$0xf]
    %v494 = vld [vmem:[%s3 + $0x64] sm:$0xf]
    %v495 = vld [vmem:[%s3 + $0x68] sm:$0xf]
    %v496 = vld [vmem:[%s3 + $0x6c] sm:$0xf]
    %v497 = vld [vmem:[%s3 + $0x70] sm:$0xf]
    %v498 = vld [vmem:[%s3 + $0x74] sm:$0xf]
    %v499 = vld [vmem:[%s3 + $0x78] sm:$0xf]
    %v500 = vld [vmem:[%s3 + $0x7c] sm:$0xf]
    %v501 = vld [vmem:[%s4] sm:$0x1]
    %v503 = vlaneseq
    %v504 = vshrl.u32 %v503, 7
    %v505 = vsub.s32 0, %v504
    %v506 = vrot.slane %v501, %v505
    %v540 = vunpack.c.l.b16 %v469
    %v541 = vunpack.c.l.b16 %v470
    %v542 = vunpack.c.l.b16 %v471
    %v543 = vunpack.c.l.b16 %v472
    %v544 = vunpack.c.l.b16 %v473
    %v545 = vunpack.c.l.b16 %v474
    %v546 = vunpack.c.l.b16 %v475
    %v547 = vunpack.c.l.b16 %v476
    %v548 = vunpack.c.l.b16 %v477
    %v549 = vunpack.c.l.b16 %v478
    %v550 = vunpack.c.l.b16 %v479
    %v551 = vunpack.c.l.b16 %v480
    %v552 = vunpack.c.l.b16 %v481
    %v553 = vunpack.c.l.b16 %v482
    %v554 = vunpack.c.l.b16 %v483
    %v555 = vunpack.c.l.b16 %v484
    %v556 = vunpack.c.l.b16 %v485
    %v557 = vunpack.c.l.b16 %v486
    %v558 = vunpack.c.l.b16 %v487
    %v559 = vunpack.c.l.b16 %v488
    %v560 = vunpack.c.l.b16 %v489
    %v561 = vunpack.c.l.b16 %v490
    %v562 = vunpack.c.l.b16 %v491
    %v563 = vunpack.c.l.b16 %v492
    %v564 = vunpack.c.l.b16 %v493
    %v565 = vunpack.c.l.b16 %v494
    %v566 = vunpack.c.l.b16 %v495
    %v567 = vunpack.c.l.b16 %v496
    %v568 = vunpack.c.l.b16 %v497
    %v569 = vunpack.c.l.b16 %v498
    %v570 = vunpack.c.l.b16 %v499
    %v571 = vunpack.c.l.b16 %v500
    %v572 = vpack.c.b16 %v541, %v540
    %v573 = vpack.c.b16 %v543, %v542
    %v574 = vpack.c.b16 %v545, %v544
    %v575 = vpack.c.b16 %v547, %v546
    %v576 = vpack.c.b16 %v549, %v548
    %v577 = vpack.c.b16 %v551, %v550
    %v578 = vpack.c.b16 %v553, %v552
    %v579 = vpack.c.b16 %v555, %v554
    %v580 = vpack.c.b16 %v557, %v556
    %v581 = vpack.c.b16 %v559, %v558
    %v582 = vpack.c.b16 %v561, %v560
    %v583 = vpack.c.b16 %v563, %v562
    %v584 = vpack.c.b16 %v565, %v564
    %v585 = vpack.c.b16 %v567, %v566
    %v586 = vpack.c.b16 %v569, %v568
    %v587 = vpack.c.b16 %v571, %v570
    %604 = vmatprep.subr.bf16.mxu0 0
    %605 = vmatpush1.bf16.msra.mxu0 %v579
    %606 = vmatprep.subr.bf16.mxu0 0
    %607 = vmatpush1.bf16.msra.mxu0 %v578
    %608 = vmatprep.subr.bf16.mxu0 0
    %609 = vmatpush1.bf16.msra.mxu0 %v577
    %610 = vmatprep.subr.bf16.mxu0 0
    %611 = vmatpush1.bf16.msra.mxu0 %v576
    %612 = vmatprep.subr.bf16.mxu0 0
    %613 = vmatpush1.bf16.msra.mxu0 %v575
    %614 = vmatprep.subr.bf16.mxu0 0
    %615 = vmatpush1.bf16.msra.mxu0 %v574
    %616 = vmatprep.subr.bf16.mxu0 0
    %617 = vmatpush1.bf16.msra.mxu0 %v573
    %618 = vmatprep.subr.bf16.mxu0 0
    %619 = vmatpush1.bf16.msra.mxu0 %v572
    %620 = vmatprep.subr.bf16.mxu0 0
    %621 = vmatpush2.bf16.msra.mxu0 %v587
    %622 = vmatprep.subr.bf16.mxu0 0
    %623 = vmatpush2.bf16.msra.mxu0 %v586
    %624 = vmatprep.subr.bf16.mxu0 0
    %625 = vmatpush2.bf16.msra.mxu0 %v585
    %626 = vmatprep.subr.bf16.mxu0 0
    %627 = vmatpush2.bf16.msra.mxu0 %v584
    %628 = vmatprep.subr.bf16.mxu0 0
    %629 = vmatpush2.bf16.msra.mxu0 %v583
    %630 = vmatprep.subr.bf16.mxu0 0
    %631 = vmatpush2.bf16.msra.mxu0 %v582
    %632 = vmatprep.subr.bf16.mxu0 0
    %633 = vmatpush2.bf16.msra.mxu0 %v581
    %634 = vmatprep.subr.bf16.mxu0 0
    %635 = vmatpush2.bf16.msra.mxu0 %v580
    %636 = vmatprep.mubr.bf16.mxu0 %v468
    %637 = vmatmul.mubr.bf16.gmra.mxu0 %v467
    %v638 = vpop.f32.mrf.mxu0
    %v639 = vadd.f32 %v506, %v638
    %v640 = vpop.f32.mrf.mxu0
    %v641 = vpop.f32.mrf.mxu0
    %v642 = vpop.f32.mrf.mxu0
    %643 = vdwg.mxu0
    %v644 = vmax.f32 %v639, 0.0
    %v645 = vpack.c.bf16 %v644, %v644
    %v646 = vld [vmem:[%s5] sm:$0xf]
    %v647 = vld [vmem:[%s5 + $0x4] sm:$0xf]
    %v648 = vld [vmem:[%s5 + $0x8] sm:$0xf]
    %v649 = vld [vmem:[%s5 + $0xc] sm:$0xf]
    %v650 = vld [vmem:[%s5 + $0x10] sm:$0xf]
    %v651 = vld [vmem:[%s5 + $0x14] sm:$0xf]
    %v652 = vld [vmem:[%s5 + $0x18] sm:$0xf]
    %v653 = vld [vmem:[%s5 + $0x1c] sm:$0xf]
    %v654 = vld [vmem:[%s5 + $0x20] sm:$0xf]
    %v655 = vld [vmem:[%s5 + $0x24] sm:$0xf]
    %v656 = vld [vmem:[%s5 + $0x28] sm:$0xf]
    %v657 = vld [vmem:[%s5 + $0x2c] sm:$0xf]
    %v658 = vld [vmem:[%s5 + $0x30] sm:$0xf]
    %v659 = vld [vmem:[%s5 + $0x34] sm:$0xf]
    %v660 = vld [vmem:[%s5 + $0x38] sm:$0xf]
    %v661 = vld [vmem:[%s5 + $0x3c] sm:$0xf]
    %v662 = vld [vmem:[%s6] sm:$0x1]
    %v664 = vlaneseq
    %v665 = vshrl.u32 %v664, 7
    %v666 = vsub.s32 0, %v665
    %v667 = vrot.slane %v662, %v666
    %v685 = vunpack.c.l.b16 %v646
    %v686 = vunpack.c.l.b16 %v647
    %v687 = vunpack.c.l.b16 %v648
    %v688 = vunpack.c.l.b16 %v649
    %v689 = vunpack.c.l.b16 %v650
    %v690 = vunpack.c.l.b16 %v651
    %v691 = vunpack.c.l.b16 %v652
    %v692 = vunpack.c.l.b16 %v653
    %v693 = vunpack.c.l.b16 %v654
    %v694 = vunpack.c.l.b16 %v655
    %v695 = vunpack.c.l.b16 %v656
    %v696 = vunpack.c.l.b16 %v657
    %v697 = vunpack.c.l.b16 %v658
    %v698 = vunpack.c.l.b16 %v659
    %v699 = vunpack.c.l.b16 %v660
    %v700 = vunpack.c.l.b16 %v661
    %v701 = vpack.c.b16 %v686, %v685
    %v702 = vpack.c.b16 %v688, %v687
    %v703 = vpack.c.b16 %v690, %v689
    %v704 = vpack.c.b16 %v692, %v691
    %v705 = vpack.c.b16 %v694, %v693
    %v706 = vpack.c.b16 %v696, %v695
    %v707 = vpack.c.b16 %v698, %v697
    %v708 = vpack.c.b16 %v700, %v699
    %717 = vmatprep.subr.bf16.mxu0 0
    %718 = vmatpush1.bf16.msra.mxu0 %v708
    %719 = vmatprep.subr.bf16.mxu0 0
    %720 = vmatpush1.bf16.msra.mxu0 %v707
    %721 = vmatprep.subr.bf16.mxu0 0
    %722 = vmatpush1.bf16.msra.mxu0 %v706
    %723 = vmatprep.subr.bf16.mxu0 0
    %724 = vmatpush1.bf16.msra.mxu0 %v705
    %725 = vmatprep.subr.bf16.mxu0 0
    %726 = vmatpush1.bf16.msra.mxu0 %v704
    %727 = vmatprep.subr.bf16.mxu0 0
    %728 = vmatpush1.bf16.msra.mxu0 %v703
    %729 = vmatprep.subr.bf16.mxu0 0
    %730 = vmatpush1.bf16.msra.mxu0 %v702
    %731 = vmatprep.subr.bf16.mxu0 0
    %732 = vmatpush1.bf16.msra.mxu0 %v701
    %733 = vmatprep.subr.bf16.mxu0 0
    %734 = vmatpush2.bf16.msra.mxu0 0
    %735 = vmatprep.subr.bf16.mxu0 0
    %736 = vmatpush2.bf16.msra.mxu0 0
    %737 = vmatprep.subr.bf16.mxu0 0
    %738 = vmatpush2.bf16.msra.mxu0 0
    %739 = vmatprep.subr.bf16.mxu0 0
    %740 = vmatpush2.bf16.msra.mxu0 0
    %741 = vmatprep.subr.bf16.mxu0 0
    %742 = vmatpush2.bf16.msra.mxu0 0
    %743 = vmatprep.subr.bf16.mxu0 0
    %744 = vmatpush2.bf16.msra.mxu0 0
    %745 = vmatprep.subr.bf16.mxu0 0
    %746 = vmatpush2.bf16.msra.mxu0 0
    %747 = vmatprep.subr.bf16.mxu0 0
    %748 = vmatpush2.bf16.msra.mxu0 0
    %749 = vmatprep.mubr.bf16.mxu0 0
    %750 = vmatmul.mubr.bf16.gmra.mxu0 %v645
    %v751 = vpop.f32.mrf.mxu0
    %v752 = vadd.f32 %v667, %v751
    %v753 = vpop.f32.mrf.mxu0
    %v754 = vpop.f32.mrf.mxu0
    %v755 = vpop.f32.mrf.mxu0
    %756 = vdwg.mxu0
    %v757 = vmax.f32 %v752, 0.0
    %v758 = vpack.c.bf16 %v757, %v757
    %v759 = vld [vmem:[%s7] sm:$0xf]
    %v760 = vld [vmem:[%s7 + $0x4] sm:$0xf]
    %v761 = vld [vmem:[%s7 + $0x8] sm:$0xf]
    %v762 = vld [vmem:[%s7 + $0xc] sm:$0xf]
    %v763 = vld [vmem:[%s7 + $0x10] sm:$0xf]
    %v764 = vld [vmem:[%s7 + $0x14] sm:$0xf]
    %v765 = vld [vmem:[%s7 + $0x18] sm:$0xf]
    %v766 = vld [vmem:[%s7 + $0x1c] sm:$0xf]
    %v767 = vld [vmem:[%s7 + $0x20] sm:$0xf]
    %v768 = vld [vmem:[%s7 + $0x24] sm:$0xf]
    %v769 = vld [vmem:[%s7 + $0x28] sm:$0xf]
    %v770 = vld [vmem:[%s7 + $0x2c] sm:$0xf]
    %v771 = vld [vmem:[%s7 + $0x30] sm:$0xf]
    %v772 = vld [vmem:[%s7 + $0x34] sm:$0xf]
    %v773 = vld [vmem:[%s7 + $0x38] sm:$0xf]
    %v774 = vld [vmem:[%s7 + $0x3c] sm:$0xf]
    %v775 = vld [vmem:[%s8] sm:$0x1]
    %v777 = vlaneseq
    %v778 = vshrl.u32 %v777, 7
    %v779 = vsub.s32 0, %v778
    %v780 = vrot.slane %v775, %v779
    %v798 = vunpack.c.l.b16 %v759
    %v799 = vunpack.c.l.b16 %v760
    %v800 = vunpack.c.l.b16 %v761
    %v801 = vunpack.c.l.b16 %v762
    %v802 = vunpack.c.l.b16 %v763
    %v803 = vunpack.c.l.b16 %v764
    %v804 = vunpack.c.l.b16 %v765
    %v805 = vunpack.c.l.b16 %v766
    %v806 = vunpack.c.l.b16 %v767
    %v807 = vunpack.c.l.b16 %v768
    %v808 = vunpack.c.l.b16 %v769
    %v809 = vunpack.c.l.b16 %v770
    %v810 = vunpack.c.l.b16 %v771
    %v811 = vunpack.c.l.b16 %v772
    %v812 = vunpack.c.l.b16 %v773
    %v813 = vunpack.c.l.b16 %v774
    %v814 = vpack.c.b16 %v799, %v798
    %v815 = vpack.c.b16 %v801, %v800
    %v816 = vpack.c.b16 %v803, %v802
    %v817 = vpack.c.b16 %v805, %v804
    %v818 = vpack.c.b16 %v807, %v806
    %v819 = vpack.c.b16 %v809, %v808
    %v820 = vpack.c.b16 %v811, %v810
    %v821 = vpack.c.b16 %v813, %v812
    %830 = vmatprep.subr.bf16.mxu0 0
    %831 = vmatpush1.bf16.msra.mxu0 %v821
    %832 = vmatprep.subr.bf16.mxu0 0
    %833 = vmatpush1.bf16.msra.mxu0 %v820
    %834 = vmatprep.subr.bf16.mxu0 0
    %835 = vmatpush1.bf16.msra.mxu0 %v819
    %836 = vmatprep.subr.bf16.mxu0 0
    %837 = vmatpush1.bf16.msra.mxu0 %v818
    %838 = vmatprep.subr.bf16.mxu0 0
    %839 = vmatpush1.bf16.msra.mxu0 %v817
    %840 = vmatprep.subr.bf16.mxu0 0
    %841 = vmatpush1.bf16.msra.mxu0 %v816
    %842 = vmatprep.subr.bf16.mxu0 0
    %843 = vmatpush1.bf16.msra.mxu0 %v815
    %844 = vmatprep.subr.bf16.mxu0 0
    %845 = vmatpush1.bf16.msra.mxu0 %v814
    %846 = vmatprep.subr.bf16.mxu0 0
    %847 = vmatpush2.bf16.msra.mxu0 0
    %848 = vmatprep.subr.bf16.mxu0 0
    %849 = vmatpush2.bf16.msra.mxu0 0
    %850 = vmatprep.subr.bf16.mxu0 0
    %851 = vmatpush2.bf16.msra.mxu0 0
    %852 = vmatprep.subr.bf16.mxu0 0
    %853 = vmatpush2.bf16.msra.mxu0 0
    %854 = vmatprep.subr.bf16.mxu0 0
    %855 = vmatpush2.bf16.msra.mxu0 0
    %856 = vmatprep.subr.bf16.mxu0 0
    %857 = vmatpush2.bf16.msra.mxu0 0
    %858 = vmatprep.subr.bf16.mxu0 0
    %859 = vmatpush2.bf16.msra.mxu0 0
    %860 = vmatprep.subr.bf16.mxu0 0
    %861 = vmatpush2.bf16.msra.mxu0 0
    %862 = vmatprep.mubr.bf16.mxu0 0
    %863 = vmatmul.mubr.bf16.gmra.mxu0 %v758
    %v864 = vpop.f32.mrf.mxu0
    %v865 = vadd.f32 %v780, %v864
    %v866 = vpop.f32.mrf.mxu0
    %v867 = vpop.f32.mrf.mxu0
    %v868 = vpop.f32.mrf.mxu0
    %869 = vdwg.mxu0
    %v870 = vmax.f32 %v865, 0.0
    %v871 = vpack.c.bf16 %v870, %v870
    %v872 = vld [vmem:[%s9] sm:$0xf]
    %v873 = vld [vmem:[%s9 + $0x4] sm:$0xf]
    %v874 = vld [vmem:[%s9 + $0x8] sm:$0xf]
    %v875 = vld [vmem:[%s9 + $0xc] sm:$0xf]
    %v876 = vld [vmem:[%s9 + $0x10] sm:$0xf]
    %v877 = vld [vmem:[%s9 + $0x14] sm:$0xf]
    %v878 = vld [vmem:[%s9 + $0x18] sm:$0xf]
    %v879 = vld [vmem:[%s9 + $0x1c] sm:$0xf]
    %v880 = vld [vmem:[%s9 + $0x20] sm:$0xf]
    %v881 = vld [vmem:[%s9 + $0x24] sm:$0xf]
    %v882 = vld [vmem:[%s9 + $0x28] sm:$0xf]
    %v883 = vld [vmem:[%s9 + $0x2c] sm:$0xf]
    %v884 = vld [vmem:[%s9 + $0x30] sm:$0xf]
    %v885 = vld [vmem:[%s9 + $0x34] sm:$0xf]
    %v886 = vld [vmem:[%s9 + $0x38] sm:$0xf]
    %v887 = vld [vmem:[%s9 + $0x3c] sm:$0xf]
    %v888 = vld [vmem:[%s10] sm:$0x1]
    %v890 = vlaneseq
    %v891 = vshrl.u32 %v890, 7
    %v892 = vsub.s32 0, %v891
    %v893 = vrot.slane %v888, %v892
    %v911 = vunpack.c.l.b16 %v872
    %v912 = vunpack.c.l.b16 %v873
    %v913 = vunpack.c.l.b16 %v874
    %v914 = vunpack.c.l.b16 %v875
    %v915 = vunpack.c.l.b16 %v876
    %v916 = vunpack.c.l.b16 %v877
    %v917 = vunpack.c.l.b16 %v878
    %v918 = vunpack.c.l.b16 %v879
    %v919 = vunpack.c.l.b16 %v880
    %v920 = vunpack.c.l.b16 %v881
    %v921 = vunpack.c.l.b16 %v882
    %v922 = vunpack.c.l.b16 %v883
    %v923 = vunpack.c.l.b16 %v884
    %v924 = vunpack.c.l.b16 %v885
    %v925 = vunpack.c.l.b16 %v886
    %v926 = vunpack.c.l.b16 %v887
    %v927 = vpack.c.b16 %v912, %v911
    %v928 = vpack.c.b16 %v914, %v913
    %v929 = vpack.c.b16 %v916, %v915
    %v930 = vpack.c.b16 %v918, %v917
    %v931 = vpack.c.b16 %v920, %v919
    %v932 = vpack.c.b16 %v922, %v921
    %v933 = vpack.c.b16 %v924, %v923
    %v934 = vpack.c.b16 %v926, %v925
    %943 = vmatprep.subr.bf16.mxu0 0
    %944 = vmatpush1.bf16.msra.mxu0 %v934
    %945 = vmatprep.subr.bf16.mxu0 0
    %946 = vmatpush1.bf16.msra.mxu0 %v933
    %947 = vmatprep.subr.bf16.mxu0 0
    %948 = vmatpush1.bf16.msra.mxu0 %v932
    %949 = vmatprep.subr.bf16.mxu0 0
    %950 = vmatpush1.bf16.msra.mxu0 %v931
    %951 = vmatprep.subr.bf16.mxu0 0
    %952 = vmatpush1.bf16.msra.mxu0 %v930
    %953 = vmatprep.subr.bf16.mxu0 0
    %954 = vmatpush1.bf16.msra.mxu0 %v929
    %955 = vmatprep.subr.bf16.mxu0 0
    %956 = vmatpush1.bf16.msra.mxu0 %v928
    %957 = vmatprep.subr.bf16.mxu0 0
    %958 = vmatpush1.bf16.msra.mxu0 %v927
    %959 = vmatprep.subr.bf16.mxu0 0
    %960 = vmatpush2.bf16.msra.mxu0 0
    %961 = vmatprep.subr.bf16.mxu0 0
    %962 = vmatpush2.bf16.msra.mxu0 0
    %963 = vmatprep.subr.bf16.mxu0 0
    %964 = vmatpush2.bf16.msra.mxu0 0
    %965 = vmatprep.subr.bf16.mxu0 0
    %966 = vmatpush2.bf16.msra.mxu0 0
    %967 = vmatprep.subr.bf16.mxu0 0
    %968 = vmatpush2.bf16.msra.mxu0 0
    %969 = vmatprep.subr.bf16.mxu0 0
    %970 = vmatpush2.bf16.msra.mxu0 0
    %971 = vmatprep.subr.bf16.mxu0 0
    %972 = vmatpush2.bf16.msra.mxu0 0
    %973 = vmatprep.subr.bf16.mxu0 0
    %974 = vmatpush2.bf16.msra.mxu0 0
    %975 = vmatprep.mubr.bf16.mxu0 0
    %976 = vmatmul.mubr.bf16.gmra.mxu0 %v871
    %v977 = vpop.f32.mrf.mxu0
    %v978 = vadd.f32 %v893, %v977
    %v979 = vpop.f32.mrf.mxu0
    %v980 = vpop.f32.mrf.mxu0
    %v981 = vpop.f32.mrf.mxu0
    %982 = vdwg.mxu0
    %v983 = vmax.f32 %v978, 0.0
    %v984 = vpack.c.bf16 %v983, %v983
    %v985 = vld [vmem:[%s11] sm:$0xf]
    %v986 = vld [vmem:[%s11 + $0x4] sm:$0xf]
    %v987 = vld [vmem:[%s11 + $0x8] sm:$0xf]
    %v988 = vld [vmem:[%s11 + $0xc] sm:$0xf]
    %v989 = vld [vmem:[%s11 + $0x10] sm:$0xf]
    %v990 = vld [vmem:[%s11 + $0x14] sm:$0xf]
    %v991 = vld [vmem:[%s11 + $0x18] sm:$0xf]
    %v992 = vld [vmem:[%s11 + $0x1c] sm:$0xf]
    %v993 = vld [vmem:[%s11 + $0x20] sm:$0xf]
    %v994 = vld [vmem:[%s11 + $0x24] sm:$0xf]
    %v995 = vld [vmem:[%s11 + $0x28] sm:$0xf]
    %v996 = vld [vmem:[%s11 + $0x2c] sm:$0xf]
    %v997 = vld [vmem:[%s11 + $0x30] sm:$0xf]
    %v998 = vld [vmem:[%s11 + $0x34] sm:$0xf]
    %v999 = vld [vmem:[%s11 + $0x38] sm:$0xf]
    %v1000 = vld [vmem:[%s11 + $0x3c] sm:$0xf]
    %v1001 = vld [vmem:[%s12] sm:$0x1]
    %v1003 = vlaneseq
    %v1004 = vshrl.u32 %v1003, 7
    %v1005 = vsub.s32 0, %v1004
    %v1006 = vrot.slane %v1001, %v1005
    %v1024 = vunpack.c.l.b16 %v985
    %v1025 = vunpack.c.l.b16 %v986
    %v1026 = vunpack.c.l.b16 %v987
    %v1027 = vunpack.c.l.b16 %v988
    %v1028 = vunpack.c.l.b16 %v989
    %v1029 = vunpack.c.l.b16 %v990
    %v1030 = vunpack.c.l.b16 %v991
    %v1031 = vunpack.c.l.b16 %v992
    %v1032 = vunpack.c.l.b16 %v993
    %v1033 = vunpack.c.l.b16 %v994
    %v1034 = vunpack.c.l.b16 %v995
    %v1035 = vunpack.c.l.b16 %v996
    %v1036 = vunpack.c.l.b16 %v997
    %v1037 = vunpack.c.l.b16 %v998
    %v1038 = vunpack.c.l.b16 %v999
    %v1039 = vunpack.c.l.b16 %v1000
    %v1040 = vpack.c.b16 %v1025, %v1024
    %v1041 = vpack.c.b16 %v1027, %v1026
    %v1042 = vpack.c.b16 %v1029, %v1028
    %v1043 = vpack.c.b16 %v1031, %v1030
    %v1044 = vpack.c.b16 %v1033, %v1032
    %v1045 = vpack.c.b16 %v1035, %v1034
    %v1046 = vpack.c.b16 %v1037, %v1036
    %v1047 = vpack.c.b16 %v1039, %v1038
    %1056 = vmatprep.subr.bf16.mxu0 0
    %1057 = vmatpush1.bf16.msra.mxu0 %v1047
    %1058 = vmatprep.subr.bf16.mxu0 0
    %1059 = vmatpush1.bf16.msra.mxu0 %v1046
    %1060 = vmatprep.subr.bf16.mxu0 0
    %1061 = vmatpush1.bf16.msra.mxu0 %v1045
    %1062 = vmatprep.subr.bf16.mxu0 0
    %1063 = vmatpush1.bf16.msra.mxu0 %v1044
    %1064 = vmatprep.subr.bf16.mxu0 0
    %1065 = vmatpush1.bf16.msra.mxu0 %v1043
    %1066 = vmatprep.subr.bf16.mxu0 0
    %1067 = vmatpush1.bf16.msra.mxu0 %v1042
    %1068 = vmatprep.subr.bf16.mxu0 0
    %1069 = vmatpush1.bf16.msra.mxu0 %v1041
    %1070 = vmatprep.subr.bf16.mxu0 0
    %1071 = vmatpush1.bf16.msra.mxu0 %v1040
    %1072 = vmatprep.subr.bf16.mxu0 0
    %1073 = vmatpush2.bf16.msra.mxu0 0
    %1074 = vmatprep.subr.bf16.mxu0 0
    %1075 = vmatpush2.bf16.msra.mxu0 0
    %1076 = vmatprep.subr.bf16.mxu0 0
    %1077 = vmatpush2.bf16.msra.mxu0 0
    %1078 = vmatprep.subr.bf16.mxu0 0
    %1079 = vmatpush2.bf16.msra.mxu0 0
    %1080 = vmatprep.subr.bf16.mxu0 0
    %1081 = vmatpush2.bf16.msra.mxu0 0
    %1082 = vmatprep.subr.bf16.mxu0 0
    %1083 = vmatpush2.bf16.msra.mxu0 0
    %1084 = vmatprep.subr.bf16.mxu0 0
    %1085 = vmatpush2.bf16.msra.mxu0 0
    %1086 = vmatprep.subr.bf16.mxu0 0
    %1087 = vmatpush2.bf16.msra.mxu0 0
    %1088 = vmatprep.mubr.bf16.mxu0 0
    %1089 = vmatmul.mubr.bf16.gmra.mxu0 %v984
    %v1090 = vpop.f32.mrf.mxu0
    %v1091 = vadd.f32 %v1006, %v1090
    %v1092 = vpop.f32.mrf.mxu0
    %v1093 = vpop.f32.mrf.mxu0
    %v1094 = vpop.f32.mrf.mxu0
    %1095 = vdwg.mxu0
    %v1096 = vmax.f32 %v1091, 0.0
    %v1097 = vpack.c.bf16 %v1096, %v1096
    %v1098 = vld [vmem:[%s13] sm:$0xf]
    %v1099 = vld [vmem:[%s13 + $0x4] sm:$0xf]
    %v1100 = vld [vmem:[%s13 + $0x8] sm:$0xf]
    %v1101 = vld [vmem:[%s13 + $0xc] sm:$0xf]
    %v1102 = vld [vmem:[%s13 + $0x10] sm:$0xf]
    %v1103 = vld [vmem:[%s13 + $0x14] sm:$0xf]
    %v1104 = vld [vmem:[%s13 + $0x18] sm:$0xf]
    %v1105 = vld [vmem:[%s13 + $0x1c] sm:$0xf]
    %v1106 = vld [vmem:[%s13 + $0x20] sm:$0xf]
    %v1107 = vld [vmem:[%s13 + $0x24] sm:$0xf]
    %v1108 = vld [vmem:[%s13 + $0x28] sm:$0xf]
    %v1109 = vld [vmem:[%s13 + $0x2c] sm:$0xf]
    %v1110 = vld [vmem:[%s13 + $0x30] sm:$0xf]
    %v1111 = vld [vmem:[%s13 + $0x34] sm:$0xf]
    %v1112 = vld [vmem:[%s13 + $0x38] sm:$0xf]
    %v1113 = vld [vmem:[%s13 + $0x3c] sm:$0xf]
    %v1114 = vld [vmem:[%s14] sm:$0x1]
    %v1116 = vlaneseq
    %v1117 = vshrl.u32 %v1116, 7
    %v1118 = vsub.s32 0, %v1117
    %v1119 = vrot.slane %v1114, %v1118
    %v1137 = vunpack.c.l.b16 %v1098
    %v1138 = vunpack.c.l.b16 %v1099
    %v1139 = vunpack.c.l.b16 %v1100
    %v1140 = vunpack.c.l.b16 %v1101
    %v1141 = vunpack.c.l.b16 %v1102
    %v1142 = vunpack.c.l.b16 %v1103
    %v1143 = vunpack.c.l.b16 %v1104
    %v1144 = vunpack.c.l.b16 %v1105
    %v1145 = vunpack.c.l.b16 %v1106
    %v1146 = vunpack.c.l.b16 %v1107
    %v1147 = vunpack.c.l.b16 %v1108
    %v1148 = vunpack.c.l.b16 %v1109
    %v1149 = vunpack.c.l.b16 %v1110
    %v1150 = vunpack.c.l.b16 %v1111
    %v1151 = vunpack.c.l.b16 %v1112
    %v1152 = vunpack.c.l.b16 %v1113
    %v1153 = vpack.c.b16 %v1138, %v1137
    %v1154 = vpack.c.b16 %v1140, %v1139
    %v1155 = vpack.c.b16 %v1142, %v1141
    %v1156 = vpack.c.b16 %v1144, %v1143
    %v1157 = vpack.c.b16 %v1146, %v1145
    %v1158 = vpack.c.b16 %v1148, %v1147
    %v1159 = vpack.c.b16 %v1150, %v1149
    %v1160 = vpack.c.b16 %v1152, %v1151
    %1169 = vmatprep.subr.bf16.mxu0 0
    %1170 = vmatpush1.bf16.msra.mxu0 %v1160
    %1171 = vmatprep.subr.bf16.mxu0 0
    %1172 = vmatpush1.bf16.msra.mxu0 %v1159
    %1173 = vmatprep.subr.bf16.mxu0 0
    %1174 = vmatpush1.bf16.msra.mxu0 %v1158
    %1175 = vmatprep.subr.bf16.mxu0 0
    %1176 = vmatpush1.bf16.msra.mxu0 %v1157
    %1177 = vmatprep.subr.bf16.mxu0 0
    %1178 = vmatpush1.bf16.msra.mxu0 %v1156
    %1179 = vmatprep.subr.bf16.mxu0 0
    %1180 = vmatpush1.bf16.msra.mxu0 %v1155
    %1181 = vmatprep.subr.bf16.mxu0 0
    %1182 = vmatpush1.bf16.msra.mxu0 %v1154
    %1183 = vmatprep.subr.bf16.mxu0 0
    %1184 = vmatpush1.bf16.msra.mxu0 %v1153
    %1185 = vmatprep.subr.bf16.mxu0 0
    %1186 = vmatpush2.bf16.msra.mxu0 0
    %1187 = vmatprep.subr.bf16.mxu0 0
    %1188 = vmatpush2.bf16.msra.mxu0 0
    %1189 = vmatprep.subr.bf16.mxu0 0
    %1190 = vmatpush2.bf16.msra.mxu0 0
    %1191 = vmatprep.subr.bf16.mxu0 0
    %1192 = vmatpush2.bf16.msra.mxu0 0
    %1193 = vmatprep.subr.bf16.mxu0 0
    %1194 = vmatpush2.bf16.msra.mxu0 0
    %1195 = vmatprep.subr.bf16.mxu0 0
    %1196 = vmatpush2.bf16.msra.mxu0 0
    %1197 = vmatprep.subr.bf16.mxu0 0
    %1198 = vmatpush2.bf16.msra.mxu0 0
    %1199 = vmatprep.subr.bf16.mxu0 0
    %1200 = vmatpush2.bf16.msra.mxu0 0
    %1201 = vmatprep.mubr.bf16.mxu0 0
    %1202 = vmatmul.mubr.bf16.gmra.mxu0 %v1097
    %v1203 = vpop.f32.mrf.mxu0
    %v1204 = vadd.f32 %v1119, %v1203
    %v1205 = vpop.f32.mrf.mxu0
    %v1206 = vpop.f32.mrf.mxu0
    %v1207 = vpop.f32.mrf.mxu0
    %1208 = vdwg.mxu0
    %v1209 = vmax.f32 %v1204, 0.0
    %v1210 = vpack.c.bf16 %v1209, %v1209
    %v1211 = vld [vmem:[%s15] sm:$0xf]
    %v1212 = vld [vmem:[%s15 + $0x4] sm:$0xf]
    %v1213 = vld [vmem:[%s15 + $0x8] sm:$0xf]
    %v1214 = vld [vmem:[%s15 + $0xc] sm:$0xf]
    %v1215 = vld [vmem:[%s15 + $0x10] sm:$0xf]
    %v1216 = vld [vmem:[%s15 + $0x14] sm:$0xf]
    %v1217 = vld [vmem:[%s15 + $0x18] sm:$0xf]
    %v1218 = vld [vmem:[%s15 + $0x1c] sm:$0xf]
    %v1219 = vld [vmem:[%s15 + $0x20] sm:$0xf]
    %v1220 = vld [vmem:[%s15 + $0x24] sm:$0xf]
    %v1221 = vld [vmem:[%s15 + $0x28] sm:$0xf]
    %v1222 = vld [vmem:[%s15 + $0x2c] sm:$0xf]
    %v1223 = vld [vmem:[%s15 + $0x30] sm:$0xf]
    %v1224 = vld [vmem:[%s15 + $0x34] sm:$0xf]
    %v1225 = vld [vmem:[%s15 + $0x38] sm:$0xf]
    %v1226 = vld [vmem:[%s15 + $0x3c] sm:$0xf]
    %v1227 = vld [vmem:[%s16] sm:$0x1]
    %v1229 = vlaneseq
    %v1230 = vshrl.u32 %v1229, 7
    %v1231 = vsub.s32 0, %v1230
    %v1232 = vrot.slane %v1227, %v1231
    %v1250 = vunpack.c.l.b16 %v1211
    %v1251 = vunpack.c.l.b16 %v1212
    %v1252 = vunpack.c.l.b16 %v1213
    %v1253 = vunpack.c.l.b16 %v1214
    %v1254 = vunpack.c.l.b16 %v1215
    %v1255 = vunpack.c.l.b16 %v1216
    %v1256 = vunpack.c.l.b16 %v1217
    %v1257 = vunpack.c.l.b16 %v1218
    %v1258 = vunpack.c.l.b16 %v1219
    %v1259 = vunpack.c.l.b16 %v1220
    %v1260 = vunpack.c.l.b16 %v1221
    %v1261 = vunpack.c.l.b16 %v1222
    %v1262 = vunpack.c.l.b16 %v1223
    %v1263 = vunpack.c.l.b16 %v1224
    %v1264 = vunpack.c.l.b16 %v1225
    %v1265 = vunpack.c.l.b16 %v1226
    %v1266 = vpack.c.b16 %v1251, %v1250
    %v1267 = vpack.c.b16 %v1253, %v1252
    %v1268 = vpack.c.b16 %v1255, %v1254
    %v1269 = vpack.c.b16 %v1257, %v1256
    %v1270 = vpack.c.b16 %v1259, %v1258
    %v1271 = vpack.c.b16 %v1261, %v1260
    %v1272 = vpack.c.b16 %v1263, %v1262
    %v1273 = vpack.c.b16 %v1265, %v1264
    %1282 = vmatprep.subr.bf16.mxu0 0
    %1283 = vmatpush1.bf16.msra.mxu0 %v1273
    %1284 = vmatprep.subr.bf16.mxu0 0
    %1285 = vmatpush1.bf16.msra.mxu0 %v1272
    %1286 = vmatprep.subr.bf16.mxu0 0
    %1287 = vmatpush1.bf16.msra.mxu0 %v1271
    %1288 = vmatprep.subr.bf16.mxu0 0
    %1289 = vmatpush1.bf16.msra.mxu0 %v1270
    %1290 = vmatprep.subr.bf16.mxu0 0
    %1291 = vmatpush1.bf16.msra.mxu0 %v1269
    %1292 = vmatprep.subr.bf16.mxu0 0
    %1293 = vmatpush1.bf16.msra.mxu0 %v1268
    %1294 = vmatprep.subr.bf16.mxu0 0
    %1295 = vmatpush1.bf16.msra.mxu0 %v1267
    %1296 = vmatprep.subr.bf16.mxu0 0
    %1297 = vmatpush1.bf16.msra.mxu0 %v1266
    %1298 = vmatprep.subr.bf16.mxu0 0
    %1299 = vmatpush2.bf16.msra.mxu0 0
    %1300 = vmatprep.subr.bf16.mxu0 0
    %1301 = vmatpush2.bf16.msra.mxu0 0
    %1302 = vmatprep.subr.bf16.mxu0 0
    %1303 = vmatpush2.bf16.msra.mxu0 0
    %1304 = vmatprep.subr.bf16.mxu0 0
    %1305 = vmatpush2.bf16.msra.mxu0 0
    %1306 = vmatprep.subr.bf16.mxu0 0
    %1307 = vmatpush2.bf16.msra.mxu0 0
    %1308 = vmatprep.subr.bf16.mxu0 0
    %1309 = vmatpush2.bf16.msra.mxu0 0
    %1310 = vmatprep.subr.bf16.mxu0 0
    %1311 = vmatpush2.bf16.msra.mxu0 0
    %1312 = vmatprep.subr.bf16.mxu0 0
    %1313 = vmatpush2.bf16.msra.mxu0 0
    %1314 = vmatprep.mubr.bf16.mxu0 0
    %1315 = vmatmul.mubr.bf16.gmra.mxu0 %v1210
    %v1316 = vpop.f32.mrf.mxu0
    %v1317 = vadd.f32 %v1232, %v1316
    %v1318 = vpop.f32.mrf.mxu0
    %v1319 = vpop.f32.mrf.mxu0
    %v1320 = vpop.f32.mrf.mxu0
    %1321 = vdwg.mxu0
    %v1322 = vmax.f32 %v1317, 0.0
    %v1323 = vpack.c.bf16 %v1322, %v1322
    %v1324 = vld [vmem:[%s17] sm:$0xff]
    %v1325 = vld [vmem:[%s17 + $0x8] sm:$0xff]
    %v1326 = vld [vmem:[%s17 + $0x10] sm:$0xff]
    %v1327 = vld [vmem:[%s17 + $0x18] sm:$0xff]
    %v1328 = vld [vmem:[%s17 + $0x20] sm:$0xff]
    %v1329 = vld [vmem:[%s17 + $0x28] sm:$0xff]
    %v1330 = vld [vmem:[%s17 + $0x30] sm:$0xff]
    %v1331 = vld [vmem:[%s17 + $0x38] sm:$0xff]
    %v1332 = vld [vmem:[%s17 + $0x40] sm:$0xff]
    %v1333 = vld [vmem:[%s17 + $0x48] sm:$0xff]
    %v1334 = vld [vmem:[%s17 + $0x50] sm:$0xff]
    %v1335 = vld [vmem:[%s17 + $0x58] sm:$0xff]
    %v1336 = vld [vmem:[%s17 + $0x60] sm:$0xff]
    %v1337 = vld [vmem:[%s17 + $0x68] sm:$0xff]
    %v1338 = vld [vmem:[%s17 + $0x70] sm:$0xff]
    %v1339 = vld [vmem:[%s17 + $0x78] sm:$0xff]
    %v1340 = vld [vmem:[%s18] sm:$0x3]
    %v1342 = vlaneseq
    %v1343 = vshrl.u32 %v1342, 7
    %v1344 = vsub.s32 0, %v1343
    %v1345 = vrot.slane %v1340, %v1344
    %v1346 = vlaneseq
    %v1347 = vshrl.u32 %v1346, 7
    %v1348 = vsub.s32 1, %v1347
    %v1349 = vrot.slane %v1340, %v1348
    %v1368 = vunpack.c.l.b16 %v1324
    %v1369 = vunpack.c.h.b16 %v1324
    %v1370 = vunpack.c.l.b16 %v1325
    %v1371 = vunpack.c.h.b16 %v1325
    %v1372 = vunpack.c.l.b16 %v1326
    %v1373 = vunpack.c.h.b16 %v1326
    %v1374 = vunpack.c.l.b16 %v1327
    %v1375 = vunpack.c.h.b16 %v1327
    %v1376 = vunpack.c.l.b16 %v1328
    %v1377 = vunpack.c.h.b16 %v1328
    %v1378 = vunpack.c.l.b16 %v1329
    %v1379 = vunpack.c.h.b16 %v1329
    %v1380 = vunpack.c.l.b16 %v1330
    %v1381 = vunpack.c.h.b16 %v1330
    %v1382 = vunpack.c.l.b16 %v1331
    %v1383 = vunpack.c.h.b16 %v1331
    %v1384 = vunpack.c.l.b16 %v1332
    %v1385 = vunpack.c.h.b16 %v1332
    %v1386 = vunpack.c.l.b16 %v1333
    %v1387 = vunpack.c.h.b16 %v1333
    %v1388 = vunpack.c.l.b16 %v1334
    %v1389 = vunpack.c.h.b16 %v1334
    %v1390 = vunpack.c.l.b16 %v1335
    %v1391 = vunpack.c.h.b16 %v1335
    %v1392 = vunpack.c.l.b16 %v1336
    %v1393 = vunpack.c.h.b16 %v1336
    %v1394 = vunpack.c.l.b16 %v1337
    %v1395 = vunpack.c.h.b16 %v1337
    %v1396 = vunpack.c.l.b16 %v1338
    %v1397 = vunpack.c.h.b16 %v1338
    %v1398 = vunpack.c.l.b16 %v1339
    %v1399 = vunpack.c.h.b16 %v1339
    %v1400 = vpack.c.b16 %v1370, %v1368
    %v1401 = vpack.c.b16 %v1371, %v1369
    %v1402 = vpack.c.b16 %v1374, %v1372
    %v1403 = vpack.c.b16 %v1375, %v1373
    %v1404 = vpack.c.b16 %v1378, %v1376
    %v1405 = vpack.c.b16 %v1379, %v1377
    %v1406 = vpack.c.b16 %v1382, %v1380
    %v1407 = vpack.c.b16 %v1383, %v1381
    %v1408 = vpack.c.b16 %v1386, %v1384
    %v1409 = vpack.c.b16 %v1387, %v1385
    %v1410 = vpack.c.b16 %v1390, %v1388
    %v1411 = vpack.c.b16 %v1391, %v1389
    %v1412 = vpack.c.b16 %v1394, %v1392
    %v1413 = vpack.c.b16 %v1395, %v1393
    %v1414 = vpack.c.b16 %v1398, %v1396
    %v1415 = vpack.c.b16 %v1399, %v1397
    %1432 = vmatprep.subr.bf16.mxu0 %v1415
    %1433 = vmatpush1.bf16.msra.mxu0 %v1414
    %1434 = vmatprep.subr.bf16.mxu0 %v1413
    %1435 = vmatpush1.bf16.msra.mxu0 %v1412
    %1436 = vmatprep.subr.bf16.mxu0 %v1411
    %1437 = vmatpush1.bf16.msra.mxu0 %v1410
    %1438 = vmatprep.subr.bf16.mxu0 %v1409
    %1439 = vmatpush1.bf16.msra.mxu0 %v1408
    %1440 = vmatprep.subr.bf16.mxu0 %v1407
    %1441 = vmatpush1.bf16.msra.mxu0 %v1406
    %1442 = vmatprep.subr.bf16.mxu0 %v1405
    %1443 = vmatpush1.bf16.msra.mxu0 %v1404
    %1444 = vmatprep.subr.bf16.mxu0 %v1403
    %1445 = vmatpush1.bf16.msra.mxu0 %v1402
    %1446 = vmatprep.subr.bf16.mxu0 %v1401
    %1447 = vmatpush1.bf16.msra.mxu0 %v1400
    %1448 = vmatprep.subr.bf16.mxu0 0
    %1449 = vmatpush2.bf16.msra.mxu0 0
    %1450 = vmatprep.subr.bf16.mxu0 0
    %1451 = vmatpush2.bf16.msra.mxu0 0
    %1452 = vmatprep.subr.bf16.mxu0 0
    %1453 = vmatpush2.bf16.msra.mxu0 0
    %1454 = vmatprep.subr.bf16.mxu0 0
    %1455 = vmatpush2.bf16.msra.mxu0 0
    %1456 = vmatprep.subr.bf16.mxu0 0
    %1457 = vmatpush2.bf16.msra.mxu0 0
    %1458 = vmatprep.subr.bf16.mxu0 0
    %1459 = vmatpush2.bf16.msra.mxu0 0
    %1460 = vmatprep.subr.bf16.mxu0 0
    %1461 = vmatpush2.bf16.msra.mxu0 0
    %1462 = vmatprep.subr.bf16.mxu0 0
    %1463 = vmatpush2.bf16.msra.mxu0 0
    %1464 = vmatprep.mubr.bf16.mxu0 0
    %1465 = vmatmul.mubr.bf16.gmra.mxu0 %v1323
    %v1466 = vpop.f32.mrf.mxu0
    %v1467 = vadd.f32 %v1345, %v1466
    %v1468 = vpop.f32.mrf.mxu0
    %v1469 = vadd.f32 %v1349, %v1468
    %v1470 = vpop.f32.mrf.mxu0
    %v1471 = vpop.f32.mrf.mxu0
    %1472 = vdwg.mxu0
    %v1473 = vmax.f32 %v1467, 0.0
    %v1474 = vmax.f32 %v1469, 0.0
    %v1475 = vpack.c.bf16 %v1473, %v1473
    %v1476 = vpack.c.bf16 %v1474, %v1474
    %v1477 = vld [vmem:[%s19] sm:$0xff]
    %v1478 = vld [vmem:[%s19 + $0x8] sm:$0xf]
    %v1479 = vld [vmem:[%s19 + $0xc] sm:$0xff]
    %v1480 = vld [vmem:[%s19 + $0x14] sm:$0xf]
    %v1481 = vld [vmem:[%s19 + $0x18] sm:$0xff]
    %v1482 = vld [vmem:[%s19 + $0x20] sm:$0xf]
    %v1483 = vld [vmem:[%s19 + $0x24] sm:$0xff]
    %v1484 = vld [vmem:[%s19 + $0x2c] sm:$0xf]
    %v1485 = vld [vmem:[%s19 + $0x30] sm:$0xff]
    %v1486 = vld [vmem:[%s19 + $0x38] sm:$0xf]
    %v1487 = vld [vmem:[%s19 + $0x3c] sm:$0xff]
    %v1488 = vld [vmem:[%s19 + $0x44] sm:$0xf]
    %v1489 = vld [vmem:[%s19 + $0x48] sm:$0xff]
    %v1490 = vld [vmem:[%s19 + $0x50] sm:$0xf]
    %v1491 = vld [vmem:[%s19 + $0x54] sm:$0xff]
    %v1492 = vld [vmem:[%s19 + $0x5c] sm:$0xf]
    %v1493 = vld [vmem:[%s19 + $0x60] sm:$0xff]
    %v1494 = vld [vmem:[%s19 + $0x68] sm:$0xf]
    %v1495 = vld [vmem:[%s19 + $0x6c] sm:$0xff]
    %v1496 = vld [vmem:[%s19 + $0x74] sm:$0xf]
    %v1497 = vld [vmem:[%s19 + $0x78] sm:$0xff]
    %v1498 = vld [vmem:[%s19 + $0x80] sm:$0xf]
    %v1499 = vld [vmem:[%s19 + $0x84] sm:$0xff]
    %v1500 = vld [vmem:[%s19 + $0x8c] sm:$0xf]
    %v1501 = vld [vmem:[%s19 + $0x90] sm:$0xff]
    %v1502 = vld [vmem:[%s19 + $0x98] sm:$0xf]
    %v1503 = vld [vmem:[%s19 + $0x9c] sm:$0xff]
    %v1504 = vld [vmem:[%s19 + $0xa4] sm:$0xf]
    %v1505 = vld [vmem:[%s19 + $0xa8] sm:$0xff]
    %v1506 = vld [vmem:[%s19 + $0xb0] sm:$0xf]
    %v1507 = vld [vmem:[%s19 + $0xb4] sm:$0xff]
    %v1508 = vld [vmem:[%s19 + $0xbc] sm:$0xf]
    %v1509 = vld [vmem:[%s19 + $0xc0] sm:$0xff]
    %v1510 = vld [vmem:[%s19 + $0xc8] sm:$0xf]
    %v1511 = vld [vmem:[%s19 + $0xcc] sm:$0xff]
    %v1512 = vld [vmem:[%s19 + $0xd4] sm:$0xf]
    %v1513 = vld [vmem:[%s19 + $0xd8] sm:$0xff]
    %v1514 = vld [vmem:[%s19 + $0xe0] sm:$0xf]
    %v1515 = vld [vmem:[%s19 + $0xe4] sm:$0xff]
    %v1516 = vld [vmem:[%s19 + $0xec] sm:$0xf]
    %v1517 = vld [vmem:[%s19 + $0xf0] sm:$0xff]
    %v1518 = vld [vmem:[%s19 + $0xf8] sm:$0xf]
    %v1519 = vld [vmem:[%s19 + $0xfc] sm:$0xff]
    %v1520 = vld [vmem:[%s19 + $0x104] sm:$0xf]
    %v1521 = vld [vmem:[%s19 + $0x108] sm:$0xff]
    %v1522 = vld [vmem:[%s19 + $0x110] sm:$0xf]
    %v1523 = vld [vmem:[%s19 + $0x114] sm:$0xff]
    %v1524 = vld [vmem:[%s19 + $0x11c] sm:$0xf]
    %v1525 = vld [vmem:[%s19 + $0x120] sm:$0xff]
    %v1526 = vld [vmem:[%s19 + $0x128] sm:$0xf]
    %v1527 = vld [vmem:[%s19 + $0x12c] sm:$0xff]
    %v1528 = vld [vmem:[%s19 + $0x134] sm:$0xf]
    %v1529 = vld [vmem:[%s19 + $0x138] sm:$0xff]
    %v1530 = vld [vmem:[%s19 + $0x140] sm:$0xf]
    %v1531 = vld [vmem:[%s19 + $0x144] sm:$0xff]
    %v1532 = vld [vmem:[%s19 + $0x14c] sm:$0xf]
    %v1533 = vld [vmem:[%s19 + $0x150] sm:$0xff]
    %v1534 = vld [vmem:[%s19 + $0x158] sm:$0xf]
    %v1535 = vld [vmem:[%s19 + $0x15c] sm:$0xff]
    %v1536 = vld [vmem:[%s19 + $0x164] sm:$0xf]
    %v1537 = vld [vmem:[%s19 + $0x168] sm:$0xff]
    %v1538 = vld [vmem:[%s19 + $0x170] sm:$0xf]
    %v1539 = vld [vmem:[%s19 + $0x174] sm:$0xff]
    %v1540 = vld [vmem:[%s19 + $0x17c] sm:$0xf]
    %v1541 = vld [vmem:[%s20] sm:$0x7]
    %v1543 = vlaneseq
    %v1544 = vshrl.u32 %v1543, 7
    %v1545 = vsub.s32 0, %v1544
    %v1546 = vrot.slane %v1541, %v1545
    %v1547 = vlaneseq
    %v1548 = vshrl.u32 %v1547, 7
    %v1549 = vsub.s32 1, %v1548
    %v1550 = vrot.slane %v1541, %v1549
    %v1551 = vlaneseq
    %v1552 = vshrl.u32 %v1551, 7
    %v1553 = vsub.s32 2, %v1552
    %v1554 = vrot.slane %v1541, %v1553
    %v1622 = vunpack.c.l.b16 %v1477
    %v1623 = vunpack.c.h.b16 %v1477
    %v1624 = vunpack.c.l.b16 %v1478
    %v1625 = vunpack.c.l.b16 %v1479
    %v1626 = vunpack.c.h.b16 %v1479
    %v1627 = vunpack.c.l.b16 %v1480
    %v1628 = vunpack.c.l.b16 %v1481
    %v1629 = vunpack.c.h.b16 %v1481
    %v1630 = vunpack.c.l.b16 %v1482
    %v1631 = vunpack.c.l.b16 %v1483
    %v1632 = vunpack.c.h.b16 %v1483
    %v1633 = vunpack.c.l.b16 %v1484
    %v1634 = vunpack.c.l.b16 %v1485
    %v1635 = vunpack.c.h.b16 %v1485
    %v1636 = vunpack.c.l.b16 %v1486
    %v1637 = vunpack.c.l.b16 %v1487
    %v1638 = vunpack.c.h.b16 %v1487
    %v1639 = vunpack.c.l.b16 %v1488
    %v1640 = vunpack.c.l.b16 %v1489
    %v1641 = vunpack.c.h.b16 %v1489
    %v1642 = vunpack.c.l.b16 %v1490
    %v1643 = vunpack.c.l.b16 %v1491
    %v1644 = vunpack.c.h.b16 %v1491
    %v1645 = vunpack.c.l.b16 %v1492
    %v1646 = vunpack.c.l.b16 %v1493
    %v1647 = vunpack.c.h.b16 %v1493
    %v1648 = vunpack.c.l.b16 %v1494
    %v1649 = vunpack.c.l.b16 %v1495
    %v1650 = vunpack.c.h.b16 %v1495
    %v1651 = vunpack.c.l.b16 %v1496
    %v1652 = vunpack.c.l.b16 %v1497
    %v1653 = vunpack.c.h.b16 %v1497
    %v1654 = vunpack.c.l.b16 %v1498
    %v1655 = vunpack.c.l.b16 %v1499
    %v1656 = vunpack.c.h.b16 %v1499
    %v1657 = vunpack.c.l.b16 %v1500
    %v1658 = vunpack.c.l.b16 %v1501
    %v1659 = vunpack.c.h.b16 %v1501
    %v1660 = vunpack.c.l.b16 %v1502
    %v1661 = vunpack.c.l.b16 %v1503
    %v1662 = vunpack.c.h.b16 %v1503
    %v1663 = vunpack.c.l.b16 %v1504
    %v1664 = vunpack.c.l.b16 %v1505
    %v1665 = vunpack.c.h.b16 %v1505
    %v1666 = vunpack.c.l.b16 %v1506
    %v1667 = vunpack.c.l.b16 %v1507
    %v1668 = vunpack.c.h.b16 %v1507
    %v1669 = vunpack.c.l.b16 %v1508
    %v1670 = vunpack.c.l.b16 %v1509
    %v1671 = vunpack.c.h.b16 %v1509
    %v1672 = vunpack.c.l.b16 %v1510
    %v1673 = vunpack.c.l.b16 %v1511
    %v1674 = vunpack.c.h.b16 %v1511
    %v1675 = vunpack.c.l.b16 %v1512
    %v1676 = vunpack.c.l.b16 %v1513
    %v1677 = vunpack.c.h.b16 %v1513
    %v1678 = vunpack.c.l.b16 %v1514
    %v1679 = vunpack.c.l.b16 %v1515
    %v1680 = vunpack.c.h.b16 %v1515
    %v1681 = vunpack.c.l.b16 %v1516
    %v1682 = vunpack.c.l.b16 %v1517
    %v1683 = vunpack.c.h.b16 %v1517
    %v1684 = vunpack.c.l.b16 %v1518
    %v1685 = vunpack.c.l.b16 %v1519
    %v1686 = vunpack.c.h.b16 %v1519
    %v1687 = vunpack.c.l.b16 %v1520
    %v1688 = vunpack.c.l.b16 %v1521
    %v1689 = vunpack.c.h.b16 %v1521
    %v1690 = vunpack.c.l.b16 %v1522
    %v1691 = vunpack.c.l.b16 %v1523
    %v1692 = vunpack.c.h.b16 %v1523
    %v1693 = vunpack.c.l.b16 %v1524
    %v1694 = vunpack.c.l.b16 %v1525
    %v1695 = vunpack.c.h.b16 %v1525
    %v1696 = vunpack.c.l.b16 %v1526
    %v1697 = vunpack.c.l.b16 %v1527
    %v1698 = vunpack.c.h.b16 %v1527
    %v1699 = vunpack.c.l.b16 %v1528
    %v1700 = vunpack.c.l.b16 %v1529
    %v1701 = vunpack.c.h.b16 %v1529
    %v1702 = vunpack.c.l.b16 %v1530
    %v1703 = vunpack.c.l.b16 %v1531
    %v1704 = vunpack.c.h.b16 %v1531
    %v1705 = vunpack.c.l.b16 %v1532
    %v1706 = vunpack.c.l.b16 %v1533
    %v1707 = vunpack.c.h.b16 %v1533
    %v1708 = vunpack.c.l.b16 %v1534
    %v1709 = vunpack.c.l.b16 %v1535
    %v1710 = vunpack.c.h.b16 %v1535
    %v1711 = vunpack.c.l.b16 %v1536
    %v1712 = vunpack.c.l.b16 %v1537
    %v1713 = vunpack.c.h.b16 %v1537
    %v1714 = vunpack.c.l.b16 %v1538
    %v1715 = vunpack.c.l.b16 %v1539
    %v1716 = vunpack.c.h.b16 %v1539
    %v1717 = vunpack.c.l.b16 %v1540
    %v1718 = vpack.c.b16 %v1625, %v1622
    %v1719 = vpack.c.b16 %v1626, %v1623
    %v1720 = vpack.c.b16 %v1627, %v1624
    %v1721 = vpack.c.b16 %v1631, %v1628
    %v1722 = vpack.c.b16 %v1632, %v1629
    %v1723 = vpack.c.b16 %v1633, %v1630
    %v1724 = vpack.c.b16 %v1637, %v1634
    %v1725 = vpack.c.b16 %v1638, %v1635
    %v1726 = vpack.c.b16 %v1639, %v1636
    %v1727 = vpack.c.b16 %v1643, %v1640
    %v1728 = vpack.c.b16 %v1644, %v1641
    %v1729 = vpack.c.b16 %v1645, %v1642
    %v1730 = vpack.c.b16 %v1649, %v1646
    %v1731 = vpack.c.b16 %v1650, %v1647
    %v1732 = vpack.c.b16 %v1651, %v1648
    %v1733 = vpack.c.b16 %v1655, %v1652
    %v1734 = vpack.c.b16 %v1656, %v1653
    %v1735 = vpack.c.b16 %v1657, %v1654
    %v1736 = vpack.c.b16 %v1661, %v1658
    %v1737 = vpack.c.b16 %v1662, %v1659
    %v1738 = vpack.c.b16 %v1663, %v1660
    %v1739 = vpack.c.b16 %v1667, %v1664
    %v1740 = vpack.c.b16 %v1668, %v1665
    %v1741 = vpack.c.b16 %v1669, %v1666
    %v1742 = vpack.c.b16 %v1673, %v1670
    %v1743 = vpack.c.b16 %v1674, %v1671
    %v1744 = vpack.c.b16 %v1675, %v1672
    %v1745 = vpack.c.b16 %v1679, %v1676
    %v1746 = vpack.c.b16 %v1680, %v1677
    %v1747 = vpack.c.b16 %v1681, %v1678
    %v1748 = vpack.c.b16 %v1685, %v1682
    %v1749 = vpack.c.b16 %v1686, %v1683
    %v1750 = vpack.c.b16 %v1687, %v1684
    %v1751 = vpack.c.b16 %v1691, %v1688
    %v1752 = vpack.c.b16 %v1692, %v1689
    %v1753 = vpack.c.b16 %v1693, %v1690
    %v1754 = vpack.c.b16 %v1697, %v1694
    %v1755 = vpack.c.b16 %v1698, %v1695
    %v1756 = vpack.c.b16 %v1699, %v1696
    %v1757 = vpack.c.b16 %v1703, %v1700
    %v1758 = vpack.c.b16 %v1704, %v1701
    %v1759 = vpack.c.b16 %v1705, %v1702
    %v1760 = vpack.c.b16 %v1709, %v1706
    %v1761 = vpack.c.b16 %v1710, %v1707
    %v1762 = vpack.c.b16 %v1711, %v1708
    %v1763 = vpack.c.b16 %v1715, %v1712
    %v1764 = vpack.c.b16 %v1716, %v1713
    %v1765 = vpack.c.b16 %v1717, %v1714
    %1814 = vmatprep.subr.bf16.mxu0 %v1740
    %1815 = vmatpush1.bf16.msra.mxu0 %v1739
    %1816 = vmatprep.subr.bf16.mxu0 %v1737
    %1817 = vmatpush1.bf16.msra.mxu0 %v1736
    %1818 = vmatprep.subr.bf16.mxu0 %v1734
    %1819 = vmatpush1.bf16.msra.mxu0 %v1733
    %1820 = vmatprep.subr.bf16.mxu0 %v1731
    %1821 = vmatpush1.bf16.msra.mxu0 %v1730
    %1822 = vmatprep.subr.bf16.mxu0 %v1728
    %1823 = vmatpush1.bf16.msra.mxu0 %v1727
    %1824 = vmatprep.subr.bf16.mxu0 %v1725
    %1825 = vmatpush1.bf16.msra.mxu0 %v1724
    %1826 = vmatprep.subr.bf16.mxu0 %v1722
    %1827 = vmatpush1.bf16.msra.mxu0 %v1721
    %1828 = vmatprep.subr.bf16.mxu0 %v1719
    %1829 = vmatpush1.bf16.msra.mxu0 %v1718
    %1830 = vmatprep.subr.bf16.mxu0 %v1764
    %1831 = vmatpush2.bf16.msra.mxu0 %v1763
    %1832 = vmatprep.subr.bf16.mxu0 %v1761
    %1833 = vmatpush2.bf16.msra.mxu0 %v1760
    %1834 = vmatprep.subr.bf16.mxu0 %v1758
    %1835 = vmatpush2.bf16.msra.mxu0 %v1757
    %1836 = vmatprep.subr.bf16.mxu0 %v1755
    %1837 = vmatpush2.bf16.msra.mxu0 %v1754
    %1838 = vmatprep.subr.bf16.mxu0 %v1752
    %1839 = vmatpush2.bf16.msra.mxu0 %v1751
    %1840 = vmatprep.subr.bf16.mxu0 %v1749
    %1841 = vmatpush2.bf16.msra.mxu0 %v1748
    %1842 = vmatprep.subr.bf16.mxu0 %v1746
    %1843 = vmatpush2.bf16.msra.mxu0 %v1745
    %1844 = vmatprep.subr.bf16.mxu0 %v1743
    %1845 = vmatpush2.bf16.msra.mxu0 %v1742
    %1846 = vmatprep.mubr.bf16.mxu0 %v1476
    %1847 = vmatmul.mubr.bf16.gmra.mxu0 %v1475
    %v1848 = vpop.f32.mrf.mxu0
    %v1849 = vadd.f32 %v1546, %v1848
    %v1850 = vpop.f32.mrf.mxu0
    %v1851 = vadd.f32 %v1550, %v1850
    %v1852 = vpop.f32.mrf.mxu0
    %v1853 = vpop.f32.mrf.mxu0
    %1854 = vdwg.mxu0
    %1855 = vmatprep.subr.bf16.mxu0 0
    %1856 = vmatpush1.bf16.msra.mxu0 %v1741
    %1857 = vmatprep.subr.bf16.mxu0 0
    %1858 = vmatpush1.bf16.msra.mxu0 %v1738
    %1859 = vmatprep.subr.bf16.mxu0 0
    %1860 = vmatpush1.bf16.msra.mxu0 %v1735
    %1861 = vmatprep.subr.bf16.mxu0 0
    %1862 = vmatpush1.bf16.msra.mxu0 %v1732
    %1863 = vmatprep.subr.bf16.mxu0 0
    %1864 = vmatpush1.bf16.msra.mxu0 %v1729
    %1865 = vmatprep.subr.bf16.mxu0 0
    %1866 = vmatpush1.bf16.msra.mxu0 %v1726
    %1867 = vmatprep.subr.bf16.mxu0 0
    %1868 = vmatpush1.bf16.msra.mxu0 %v1723
    %1869 = vmatprep.subr.bf16.mxu0 0
    %1870 = vmatpush1.bf16.msra.mxu0 %v1720
    %1871 = vmatprep.subr.bf16.mxu0 0
    %1872 = vmatpush2.bf16.msra.mxu0 %v1765
    %1873 = vmatprep.subr.bf16.mxu0 0
    %1874 = vmatpush2.bf16.msra.mxu0 %v1762
    %1875 = vmatprep.subr.bf16.mxu0 0
    %1876 = vmatpush2.bf16.msra.mxu0 %v1759
    %1877 = vmatprep.subr.bf16.mxu0 0
    %1878 = vmatpush2.bf16.msra.mxu0 %v1756
    %1879 = vmatprep.subr.bf16.mxu0 0
    %1880 = vmatpush2.bf16.msra.mxu0 %v1753
    %1881 = vmatprep.subr.bf16.mxu0 0
    %1882 = vmatpush2.bf16.msra.mxu0 %v1750
    %1883 = vmatprep.subr.bf16.mxu0 0
    %1884 = vmatpush2.bf16.msra.mxu0 %v1747
    %1885 = vmatprep.subr.bf16.mxu0 0
    %1886 = vmatpush2.bf16.msra.mxu0 %v1744
    %1887 = vmatprep.mubr.bf16.mxu0 %v1476
    %1888 = vmatmul.mubr.bf16.gmra.mxu0 %v1475
    %v1889 = vpop.f32.mrf.mxu0
    %v1890 = vadd.f32 %v1554, %v1889
    %v1891 = vpop.f32.mrf.mxu0
    %v1892 = vpop.f32.mrf.mxu0
    %v1893 = vpop.f32.mrf.mxu0
    %1894 = vdwg.mxu0
    %v1895 = vsub.f32 0.0, %v1849
    %v1896 = vsub.f32 0.0, %v1851
    %v1897 = vsub.f32 0.0, %v1890
    %v1898 = vmul.f32 %v1895, 1.442695
    %v1899 = vpow.pop %v1898
    %v1900 = vmul.f32 %v1896, 1.442695
    %v1901 = vpow.pop %v1900
    %v1902 = vmul.f32 %v1897, 1.442695
    %v1903 = vpow.pop %v1902
    %v1904 = vadd.f32 %v1899, 1.0
    %v1905 = vadd.f32 %v1901, 1.0
    %v1906 = vadd.f32 %v1903, 1.0
    %v1907 = vrcp.pop %v1904
    %v1908 = vrcp.pop %v1905
    %v1909 = vrcp.pop %v1906
    %1910 = vst [vmem:[#allocation2] sm:$0xff] %v1907
    %1911 = vst [vmem:[#allocation2 + $0x8] sm:$0xff] %v1908
    %1912 = vst [vmem:[#allocation2 + $0x10] sm:$0xff] %v1909
    // Predicated region
    $region86: #{network_forward.1} parent=1 // pred_check
      _
    $region87: #{network_forward.1} parent=1 // pred_check_branch
      %1914 = sbr.rel (0) target = $region89
    $region88: #{network_forward.1} parent=1 // pred_region
      %s1916 = ssub.s32 384, 384
      %1917 = vsyncadd [#allocation3], %s1916
      %s1919 = sshll.u32 [#allocation2], 4
      %s1920 = int_to_ptr.vmem [resolvable:$true] %s1919
      %1922 = dma.vmem_to_hbm [thread:$0]  %s1920, 384, %s21, [#allocation3]
    $region89: #{network_forward.1} parent=1 // pred_fallthru
      _
    // Predicated region
    $region90: #{network_forward.1} parent=1 // pred_check
      _
    $region91: #{network_forward.1} parent=1 // pred_check_branch
      %1924 = sbr.rel (0) target = $region93
    $region92: #{network_forward.1} parent=1 // pred_region
      %1925 = dma.done [#allocation3], 384
    $region93: #{network_forward.1} parent=1 // pred_fallthru
      _
    %1926 = vsyncpa [#allocation3], 1

</llo_original>
